<compile_context>
chip_gen: v6e
topology: v6e:2x2x1
jax: 0.10.0
libtpu: 0.0.40
codegen_flags: <defaults>
</compile_context>

<pallas_src>
import functools

import jax
import jax.numpy as jnp
from jax.experimental import pallas as pl
from jax.experimental.pallas import tpu as pltpu

LANE = 128


def _layernorm(z, w, b, eps=1e-5):
    mu = jnp.mean(z, axis=-1, keepdims=True)
    var = jnp.mean((z - mu) ** 2, axis=-1, keepdims=True)
    return (z - mu) * jax.lax.rsqrt(var + eps) * w + b


# ----------------------------------------------------------------------------
# Pallas kernel: MHA (+ per-query entropy of head-averaged weights) + norm1
#                + feed-forward + norm2, fully fused, gridless.
# ----------------------------------------------------------------------------
def _mtl_kernel(kvlen_ref, x_ref, mem_ref,
                wqkv_ref, bqkv_ref, wo_ref, bo_ref,
                ln1w_ref, ln1b_ref, ln2w_ref, ln2b_ref,
                w1_ref, b1_ref, w2_ref, b2_ref,
                out_ref, ent_ref,
                *, seq_len: int, num_heads: int, head_dim: int):
    f32, bf16 = jnp.float32, jnp.bfloat16
    S = seq_len
    Dh = head_dim
    E = num_heads * head_dim

    x = x_ref[...]                                      # (S, E) f32, residual path
    kv = jnp.concatenate([x, mem_ref[...]], axis=0)     # (KV, E) f32, in-kernel assembly
    KV = kv.shape[0]

    # Key-padding bias from one SMEM scalar (no mask DMA from the wrapper).
    kv_len = kvlen_ref[0]
    col = jax.lax.broadcasted_iota(jnp.int32, (1, KV), 1)
    key_bias = jnp.where(col < kv_len, jnp.float32(0.0), jnp.float32(-1e30))

    # One fused, lane-dense QKV projection: (KV, E) x (E, 3E) -> (KV, 3E).
    proj = jnp.dot(kv.astype(bf16), wqkv_ref[...],
                   preferred_element_type=f32) + bqkv_ref[...]
    # Queries are the first S rows of the projection; K/V kept bf16 after the
    # f32 bias add (MXU-native inputs, half the live footprint).
    q_all = proj[:S, 0:E].astype(bf16)                  # (S, E)
    k_all = proj[:, E:2 * E].astype(bf16)               # (KV, E)
    v_all = proj[:, 2 * E:3 * E].astype(bf16)           # (KV, E)

    scale = 1.0 / float(Dh) ** 0.5
    aw_sum = jnp.zeros((S, KV), f32)
    ctxs = []
    for h in range(num_heads):                          # static unroll (H = 4)
        c0, c1 = h * Dh, (h + 1) * Dh
        # (S, Dh) x (KV, Dh) -> (S, KV); contract last dims, no explicit k.T
        s = jax.lax.dot_general(q_all[:, c0:c1], k_all[:, c0:c1],
                                (((1,), (1,)), ((), ())),
                                preferred_element_type=f32)
        s = s * scale + key_bias
        m = jnp.max(s, axis=-1, keepdims=True)
        p = jnp.exp(s - m)
        denom = jnp.sum(p, axis=-1, keepdims=True)
        p = p * pl.reciprocal(denom, approx=True)       # EUP slot, VALU-free
        aw_sum = aw_sum + p
        ctxs.append(jnp.dot(p.astype(bf16), v_all[:, c0:c1],
                            preferred_element_type=f32))

    # Lane-concat the 4 head contexts, single (S,E)x(E,E) output projection.
    ctx = jnp.concatenate(ctxs, axis=1).astype(bf16)    # (S, E)
    attn_out = jnp.dot(ctx, wo_ref[...], preferred_element_type=f32) + bo_ref[...]

    x2 = _layernorm(x + attn_out, ln1w_ref[...], ln1b_ref[...])

    h1 = jnp.dot(x2.astype(bf16), w1_ref[...], preferred_element_type=f32)
    h1 = jnp.maximum(h1 + b1_ref[...], 0.0)             # ReLU, f32
    ff = jnp.dot(h1.astype(bf16), w2_ref[...], preferred_element_type=f32)
    ff = ff + b2_ref[...]

    out = _layernorm(x2 + ff, ln2w_ref[...], ln2b_ref[...])
    out_ref[...] = out.astype(out_ref.dtype)

    # Entropy of the head-averaged attention matrix (attn_w.mean(dim=1)[0] with
    # average_attn_weights=False). Masked columns contribute exactly 0.
    aw = aw_sum * (1.0 / num_heads)
    ent = -jnp.sum(aw * jnp.log(aw + 1e-8), axis=-1, keepdims=True)    # (S, 1)
    ent_ref[...] = jnp.broadcast_to(ent, ent_ref.shape).astype(ent_ref.dtype)


# ----------------------------------------------------------------------------
# Parameter init + kernel-layout preparation
# ----------------------------------------------------------------------------
def init_params(key, embed_dim):
    E = embed_dim
    ks = jax.random.split(key, 6)
    scale = 0.02
    f32 = jnp.float32
    return {
        "wq": scale * jax.random.normal(ks[0], (E, E), f32),
        "wk": scale * jax.random.normal(ks[1], (E, E), f32),
        "wv": scale * jax.random.normal(ks[2], (E, E), f32),
        "bq": jnp.zeros((E,), f32), "bk": jnp.zeros((E,), f32),
        "bv": jnp.zeros((E,), f32),
        "wo": scale * jax.random.normal(ks[3], (E, E), f32),
        "bo": jnp.zeros((E,), f32),
        "ln1w": jnp.ones((E,), f32), "ln1b": jnp.zeros((E,), f32),
        "ln2w": jnp.ones((E,), f32), "ln2b": jnp.zeros((E,), f32),
        "w1": scale * jax.random.normal(ks[4], (E, 4 * E), f32),
        "b1": jnp.zeros((4 * E,), f32),
        "w2": scale * jax.random.normal(ks[5], (4 * E, E), f32),
        "b2": jnp.zeros((E,), f32),
    }


def prepare_params(p, num_heads):
    """Pack QKV into one (E, 3E) bf16 block; cast matmul weights to bf16."""
    E = p["wq"].shape[0]
    bf16, f32 = jnp.bfloat16, jnp.float32
    return {
        "wqkv": jnp.concatenate([p["wq"], p["wk"], p["wv"]], axis=1).astype(bf16),
        "bqkv": jnp.concatenate([p["bq"], p["bk"], p["bv"]]).reshape(1, 3 * E).astype(f32),
        "wo": p["wo"].astype(bf16),
        "bo": p["bo"].reshape(1, E).astype(f32),
        "ln1w": p["ln1w"].reshape(1, E).astype(f32),
        "ln1b": p["ln1b"].reshape(1, E).astype(f32),
        "ln2w": p["ln2w"].reshape(1, E).astype(f32),
        "ln2b": p["ln2b"].reshape(1, E).astype(f32),
        "w1": p["w1"].astype(bf16), "b1": p["b1"].reshape(1, -1).astype(f32),
        "w2": p["w2"].astype(bf16), "b2": p["b2"].reshape(1, -1).astype(f32),
    }


# ----------------------------------------------------------------------------
# One fully on-device, jitted step: attention layer + memory-bank update.
# Memory bank is fixed-capacity with a valid count → identical shapes every
# step (single compile, no host sync).
# ----------------------------------------------------------------------------
def make_step(*, embed_dim, num_heads, seq_len, mem_size_base, threshold_factor):
    E, S, H = embed_dim, seq_len, num_heads
    Dh = E // H
    mem_cap = ((mem_size_base + S + 7) // 8) * 8     # sublane-aligned bank capacity

    smem = pl.BlockSpec(memory_space=pltpu.MemorySpace.SMEM)
    vmem = pl.BlockSpec(memory_space=pltpu.MemorySpace.VMEM)
    call = pl.pallas_call(
        functools.partial(_mtl_kernel, seq_len=S, num_heads=H, head_dim=Dh),
        out_shape=(jax.ShapeDtypeStruct((S, E), jnp.float32),
                   jax.ShapeDtypeStruct((S, LANE), jnp.float32)),
        in_specs=[smem] + [vmem] * 14,
        out_specs=(vmem, vmem),
    )

    @jax.jit
    def step(kp, x, mem_x, mem_ent, mem_count):
        x2d = x[0]                                                   # (S, E)
        kv_len = jnp.reshape(mem_count + S, (1,)).astype(jnp.int32)  # SMEM scalar

        out2d, ent_full = call(
            kv_len, x2d, mem_x,
            kp["wqkv"], kp["bqkv"], kp["wo"], kp["bo"],
            kp["ln1w"], kp["ln1b"], kp["ln2w"], kp["ln2b"],
            kp["w1"], kp["b1"], kp["w2"], kp["b2"])
        ent = ent_full[:, 0]                                         # (S,)

        # ---- on-device memory-bank update (fixed capacity + valid count) ----
        bank_x = jax.lax.dynamic_update_slice(mem_x, x2d, (mem_count, jnp.int32(0)))
        bank_e = jax.lax.dynamic_update_slice(mem_ent, ent, (mem_count,))
        new_count = mem_count + S

        rows = jnp.arange(mem_cap)
        valid = rows < new_count
        mean_e = jnp.sum(jnp.where(valid, bank_e, 0.0)) / new_count.astype(jnp.float32)
        keep = valid & (bank_e >= mean_e * threshold_factor)
        n_keep = jnp.sum(keep.astype(jnp.int32))
        use_topk = n_keep > mem_size_base

        # Single stable argsort covering both prune branches:
        #  - top-k: valid rows by descending entropy (matches torch.topk order)
        #  - threshold: kept rows first, original order preserved
        topk_key = jnp.where(valid, -bank_e, jnp.inf)
        compact_key = jnp.where(keep, 0.0, 1.0)
        perm = jnp.argsort(jnp.where(use_topk, topk_key, compact_key), stable=True)
        pruned_x = bank_x[perm]
        pruned_e = bank_e[perm]
        pruned_count = jnp.where(use_topk, jnp.int32(mem_size_base), n_keep)

        do_prune = new_count > mem_size_base
        mem_x_new = jnp.where(do_prune, pruned_x, bank_x)
        mem_ent_new = jnp.where(do_prune, pruned_e, bank_e)
        mem_count_new = jnp.where(do_prune, pruned_count, new_count)

        # Zero the invalid tail so padded KV rows stay deterministic zeros.
        live = rows < mem_count_new
        mem_x_new = jnp.where(live[:, None], mem_x_new, 0.0)
        mem_ent_new = jnp.where(live, mem_ent_new, 0.0)

        ent_eff = jnp.sum(mem_ent_new) / mem_count_new.astype(jnp.float32)
        return out2d[None], mem_x_new, mem_ent_new, mem_count_new, ent_eff

    def init_state():
        return (jnp.zeros((mem_cap, E), jnp.float32),
                jnp.zeros((mem_cap,), jnp.float32),
                jnp.int32(0))

    return step, init_state


# ----------------------------------------------------------------------------
# Pure-JAX f32 reference of the transformer layer (for a tolerance check).
# ----------------------------------------------------------------------------
def ref_forward(p, x2d, kv, num_heads):
    E = x2d.shape[-1]
    H, Dh = num_heads, x2d.shape[-1] // num_heads
    q = x2d @ p["wq"] + p["bq"]
    k = kv @ p["wk"] + p["bk"]
    v = kv @ p["wv"] + p["bv"]
    S, KV = q.shape[0], k.shape[0]
    qh = q.reshape(S, H, Dh).transpose(1, 0, 2)
    kh = k.reshape(KV, H, Dh).transpose(1, 0, 2)
    vh = v.reshape(KV, H, Dh).transpose(1, 0, 2)
    s = jnp.einsum("hqd,hkd->hqk", qh, kh) / jnp.sqrt(jnp.float32(Dh))
    pa = jax.nn.softmax(s, axis=-1)
    ctx = jnp.einsum("hqk,hkd->hqd", pa, vh).transpose(1, 0, 2).reshape(S, E)
    attn_out = ctx @ p["wo"] + p["bo"]
    x2 = _layernorm(x2d + attn_out, p["ln1w"], p["ln1b"])
    ff = jnp.maximum(x2 @ p["w1"] + p["b1"], 0.0) @ p["w2"] + p["b2"]
    out = _layernorm(x2 + ff, p["ln2w"], p["ln2b"])
    return out


if __name__ == "__main__":
    embed_dim = 128
    num_heads = 4
    seq_len = 8
    mem_size_base = 12          # small so the pruning branch is exercised
    threshold_factor = 1.0

    key = jax.random.PRNGKey(0)
    pkey, key = jax.random.split(key)
    params = init_params(pkey, embed_dim)
    kparams = prepare_params(params, num_heads)

    step, init_state = make_step(embed_dim=embed_dim, num_heads=num_heads,
                                 seq_len=seq_len, mem_size_base=mem_size_base,
                                 threshold_factor=threshold_factor)
    mem_x, mem_ent, mem_count = init_state()

    out = ent_eff = None
    for _ in range(3):          # step 1: empty memory, step 2: concat, step 3: prune
        key, sub = jax.random.split(key)
        x = jax.random.normal(sub, (1, seq_len, embed_dim), jnp.float32)

        # f32 reference on the current (pre-step) kernel memory state.
        n_valid = int(mem_count)
        kv_rows = (x[0] if n_valid == 0
                   else jnp.concatenate([mem_x[:n_valid], x[0]], axis=0))
        ref_out = ref_forward(params, x[0], kv_rows, num_heads)

        out, mem_x, mem_ent, mem_count, ent_eff = step(
            kparams, x, mem_x, mem_ent, mem_count)

        assert float(jnp.max(jnp.abs(out[0] - ref_out))) < 2e-2

    jax.block_until_ready((out, mem_x, mem_ent, mem_count, ent_eff))
    n_valid = int(mem_count)
    assert out.shape == (1, seq_len, embed_dim)
    assert bool(jnp.all(jnp.isfinite(out)))
    assert 1 <= n_valid <= mem_size_base
    assert mem_x[:n_valid].shape == (n_valid, embed_dim)
    print("KERNEL_OK")
</pallas_src>

<mosaic_0001>
module attributes {stable_mosaic.version = 11 : i64} {
  func.func @_mtl_kernel(%arg0: memref<1xi32, #tpu.memory_space<smem>>, %arg1: memref<8x128xf32, #tpu.memory_space<vmem>>, %arg2: memref<24x128xf32, #tpu.memory_space<vmem>>, %arg3: memref<128x384xbf16, #tpu.memory_space<vmem>>, %arg4: memref<1x384xf32, #tpu.memory_space<vmem>>, %arg5: memref<128x128xbf16, #tpu.memory_space<vmem>>, %arg6: memref<1x128xf32, #tpu.memory_space<vmem>>, %arg7: memref<1x128xf32, #tpu.memory_space<vmem>>, %arg8: memref<1x128xf32, #tpu.memory_space<vmem>>, %arg9: memref<1x128xf32, #tpu.memory_space<vmem>>, %arg10: memref<1x128xf32, #tpu.memory_space<vmem>>, %arg11: memref<128x512xbf16, #tpu.memory_space<vmem>>, %arg12: memref<1x512xf32, #tpu.memory_space<vmem>>, %arg13: memref<512x128xbf16, #tpu.memory_space<vmem>>, %arg14: memref<1x128xf32, #tpu.memory_space<vmem>>, %arg15: memref<8x128xf32, #tpu.memory_space<vmem>>, %arg16: memref<8x128xf32, #tpu.memory_space<vmem>>) attributes {dimension_semantics = [], scalar_prefetch = 0 : i64, scratch_operands = 0 : i64, tpu.core_type = #tpu.core_type<tc>} {
    %c0 = arith.constant 0 : index
    %c0_0 = arith.constant 0 : index
    %0 = vector.load %arg1[%c0, %c0_0] : memref<8x128xf32, #tpu.memory_space<vmem>>, vector<8x128xf32>
    %c0_1 = arith.constant 0 : index
    %c0_2 = arith.constant 0 : index
    %1 = vector.load %arg2[%c0_1, %c0_2] : memref<24x128xf32, #tpu.memory_space<vmem>>, vector<24x128xf32>
    %2 = tpu.concatenate %0, %1 in 0 : vector<8x128xf32>, vector<24x128xf32> -> vector<32x128xf32>
    %c0_3 = arith.constant 0 : index
    %3 = memref.load %arg0[%c0_3] : memref<1xi32, #tpu.memory_space<smem>>
    %4 = tpu.iota {dimensions = array<i32: 1>} : vector<1x32xi32>
    %5 = vector.broadcast %3 : i32 to vector<1x32xi32>
    %6 = arith.cmpi slt, %4, %5 : vector<1x32xi32>
    %cst = arith.constant 0.000000e+00 : f32
    %cst_4 = arith.constant -1.000000e+30 : f32
    %7 = vector.broadcast %cst : f32 to vector<1x32xf32>
    %8 = vector.broadcast %cst_4 : f32 to vector<1x32xf32>
    %9 = arith.select %6, %7, %8 : vector<1x32xi1>, vector<1x32xf32>
    %10 = arith.truncf %2 : vector<32x128xf32> to vector<32x128xbf16>
    %c0_5 = arith.constant 0 : index
    %c0_6 = arith.constant 0 : index
    %11 = vector.load %arg3[%c0_5, %c0_6] : memref<128x384xbf16, #tpu.memory_space<vmem>>, vector<128x384xbf16>
    %cst_7 = arith.constant dense<0.000000e+00> : vector<32x384xf32>
    %12 = tpu.matmul %10, %11, %cst_7 {dimension_numbers = #tpu.dot_dimension_numbers<[1], [0], [0], [1], [0, 0, 1, 1], [], []>} : vector<32x128xbf16>, vector<128x384xbf16>, vector<32x384xf32> -> vector<32x384xf32>
    %c0_8 = arith.constant 0 : index
    %c0_9 = arith.constant 0 : index
    %13 = vector.load %arg4[%c0_8, %c0_9] : memref<1x384xf32, #tpu.memory_space<vmem>>, vector<1x384xf32>
    %14 = vector.broadcast %13 : vector<1x384xf32> to vector<32x384xf32>
    %15 = arith.addf %12, %14 : vector<32x384xf32>
    %16 = vector.extract_strided_slice %15 {offsets = [0, 0], sizes = [8, 128], strides = [1, 1]} : vector<32x384xf32> to vector<8x128xf32>
    %17 = arith.truncf %16 : vector<8x128xf32> to vector<8x128xbf16>
    %18 = vector.extract_strided_slice %15 {offsets = [0, 128], sizes = [32, 128], strides = [1, 1]} : vector<32x384xf32> to vector<32x128xf32>
    %19 = arith.truncf %18 : vector<32x128xf32> to vector<32x128xbf16>
    %20 = vector.extract_strided_slice %15 {offsets = [0, 256], sizes = [32, 128], strides = [1, 1]} : vector<32x384xf32> to vector<32x128xf32>
    %21 = arith.truncf %20 : vector<32x128xf32> to vector<32x128xbf16>
    %cst_10 = arith.constant 0.000000e+00 : f32
    %22 = vector.broadcast %cst_10 : f32 to vector<8x32xf32>
    %23 = vector.extract_strided_slice %17 {offsets = [0, 0], sizes = [8, 32], strides = [1, 1]} : vector<8x128xbf16> to vector<8x32xbf16>
    %24 = vector.extract_strided_slice %19 {offsets = [0, 0], sizes = [32, 32], strides = [1, 1]} : vector<32x128xbf16> to vector<32x32xbf16>
    %cst_11 = arith.constant dense<0.000000e+00> : vector<8x32xf32>
    %25 = tpu.matmul %23, %24, %cst_11 {dimension_numbers = #tpu.dot_dimension_numbers<[1], [1], [0], [0], [0, 0, 1, 0], [], []>} : vector<8x32xbf16>, vector<32x32xbf16>, vector<8x32xf32> -> vector<8x32xf32>
    %cst_12 = arith.constant 0.176776692 : f32
    %26 = vector.broadcast %cst_12 : f32 to vector<8x32xf32>
    %27 = arith.mulf %25, %26 : vector<8x32xf32>
    %28 = vector.broadcast %9 : vector<1x32xf32> to vector<8x32xf32>
    %29 = arith.addf %27, %28 : vector<8x32xf32>
    %cst_13 = arith.constant dense<0xFF800000> : vector<8xf32>
    %30 = vector.multi_reduction <maximumf>, %29, %cst_13 [1] : vector<8x32xf32> to vector<8xf32>
    %31 = vector.shape_cast %30 : vector<8xf32> to vector<8x1xf32>
    %32 = vector.broadcast %31 : vector<8x1xf32> to vector<8x32xf32>
    %33 = arith.subf %29, %32 : vector<8x32xf32>
    %34 = math.exp %33 : vector<8x32xf32>
    %cst_14 = arith.constant dense<0.000000e+00> : vector<8xf32>
    %35 = vector.multi_reduction <add>, %34, %cst_14 [1] : vector<8x32xf32> to vector<8xf32>
    %36 = vector.shape_cast %35 : vector<8xf32> to vector<8x1xf32>
    %37 = tpu.reciprocal %36 {approx = true} : vector<8x1xf32> -> vector<8x1xf32>
    %38 = vector.broadcast %37 : vector<8x1xf32> to vector<8x32xf32>
    %39 = arith.mulf %34, %38 : vector<8x32xf32>
    %40 = arith.addf %22, %39 : vector<8x32xf32>
    %41 = arith.truncf %39 : vector<8x32xf32> to vector<8x32xbf16>
    %42 = vector.extract_strided_slice %21 {offsets = [0, 0], sizes = [32, 32], strides = [1, 1]} : vector<32x128xbf16> to vector<32x32xbf16>
    %cst_15 = arith.constant dense<0.000000e+00> : vector<8x32xf32>
    %43 = tpu.matmul %41, %42, %cst_15 {dimension_numbers = #tpu.dot_dimension_numbers<[1], [0], [0], [1], [0, 0, 1, 1], [], []>} : vector<8x32xbf16>, vector<32x32xbf16>, vector<8x32xf32> -> vector<8x32xf32>
    %44 = vector.extract_strided_slice %17 {offsets = [0, 32], sizes = [8, 32], strides = [1, 1]} : vector<8x128xbf16> to vector<8x32xbf16>
    %45 = vector.extract_strided_slice %19 {offsets = [0, 32], sizes = [32, 32], strides = [1, 1]} : vector<32x128xbf16> to vector<32x32xbf16>
    %cst_16 = arith.constant dense<0.000000e+00> : vector<8x32xf32>
    %46 = tpu.matmul %44, %45, %cst_16 {dimension_numbers = #tpu.dot_dimension_numbers<[1], [1], [0], [0], [0, 0, 1, 0], [], []>} : vector<8x32xbf16>, vector<32x32xbf16>, vector<8x32xf32> -> vector<8x32xf32>
    %cst_17 = arith.constant 0.176776692 : f32
    %47 = vector.broadcast %cst_17 : f32 to vector<8x32xf32>
    %48 = arith.mulf %46, %47 : vector<8x32xf32>
    %49 = vector.broadcast %9 : vector<1x32xf32> to vector<8x32xf32>
    %50 = arith.addf %48, %49 : vector<8x32xf32>
    %cst_18 = arith.constant dense<0xFF800000> : vector<8xf32>
    %51 = vector.multi_reduction <maximumf>, %50, %cst_18 [1] : vector<8x32xf32> to vector<8xf32>
    %52 = vector.shape_cast %51 : vector<8xf32> to vector<8x1xf32>
    %53 = vector.broadcast %52 : vector<8x1xf32> to vector<8x32xf32>
    %54 = arith.subf %50, %53 : vector<8x32xf32>
    %55 = math.exp %54 : vector<8x32xf32>
    %cst_19 = arith.constant dense<0.000000e+00> : vector<8xf32>
    %56 = vector.multi_reduction <add>, %55, %cst_19 [1] : vector<8x32xf32> to vector<8xf32>
    %57 = vector.shape_cast %56 : vector<8xf32> to vector<8x1xf32>
    %58 = tpu.reciprocal %57 {approx = true} : vector<8x1xf32> -> vector<8x1xf32>
    %59 = vector.broadcast %58 : vector<8x1xf32> to vector<8x32xf32>
    %60 = arith.mulf %55, %59 : vector<8x32xf32>
    %61 = arith.addf %40, %60 : vector<8x32xf32>
    %62 = arith.truncf %60 : vector<8x32xf32> to vector<8x32xbf16>
    %63 = vector.extract_strided_slice %21 {offsets = [0, 32], sizes = [32, 32], strides = [1, 1]} : vector<32x128xbf16> to vector<32x32xbf16>
    %cst_20 = arith.constant dense<0.000000e+00> : vector<8x32xf32>
    %64 = tpu.matmul %62, %63, %cst_20 {dimension_numbers = #tpu.dot_dimension_numbers<[1], [0], [0], [1], [0, 0, 1, 1], [], []>} : vector<8x32xbf16>, vector<32x32xbf16>, vector<8x32xf32> -> vector<8x32xf32>
    %65 = vector.extract_strided_slice %17 {offsets = [0, 64], sizes = [8, 32], strides = [1, 1]} : vector<8x128xbf16> to vector<8x32xbf16>
    %66 = vector.extract_strided_slice %19 {offsets = [0, 64], sizes = [32, 32], strides = [1, 1]} : vector<32x128xbf16> to vector<32x32xbf16>
    %cst_21 = arith.constant dense<0.000000e+00> : vector<8x32xf32>
    %67 = tpu.matmul %65, %66, %cst_21 {dimension_numbers = #tpu.dot_dimension_numbers<[1], [1], [0], [0], [0, 0, 1, 0], [], []>} : vector<8x32xbf16>, vector<32x32xbf16>, vector<8x32xf32> -> vector<8x32xf32>
    %cst_22 = arith.constant 0.176776692 : f32
    %68 = vector.broadcast %cst_22 : f32 to vector<8x32xf32>
    %69 = arith.mulf %67, %68 : vector<8x32xf32>
    %70 = vector.broadcast %9 : vector<1x32xf32> to vector<8x32xf32>
    %71 = arith.addf %69, %70 : vector<8x32xf32>
    %cst_23 = arith.constant dense<0xFF800000> : vector<8xf32>
    %72 = vector.multi_reduction <maximumf>, %71, %cst_23 [1] : vector<8x32xf32> to vector<8xf32>
    %73 = vector.shape_cast %72 : vector<8xf32> to vector<8x1xf32>
    %74 = vector.broadcast %73 : vector<8x1xf32> to vector<8x32xf32>
    %75 = arith.subf %71, %74 : vector<8x32xf32>
    %76 = math.exp %75 : vector<8x32xf32>
    %cst_24 = arith.constant dense<0.000000e+00> : vector<8xf32>
    %77 = vector.multi_reduction <add>, %76, %cst_24 [1] : vector<8x32xf32> to vector<8xf32>
    %78 = vector.shape_cast %77 : vector<8xf32> to vector<8x1xf32>
    %79 = tpu.reciprocal %78 {approx = true} : vector<8x1xf32> -> vector<8x1xf32>
    %80 = vector.broadcast %79 : vector<8x1xf32> to vector<8x32xf32>
    %81 = arith.mulf %76, %80 : vector<8x32xf32>
    %82 = arith.addf %61, %81 : vector<8x32xf32>
    %83 = arith.truncf %81 : vector<8x32xf32> to vector<8x32xbf16>
    %84 = vector.extract_strided_slice %21 {offsets = [0, 64], sizes = [32, 32], strides = [1, 1]} : vector<32x128xbf16> to vector<32x32xbf16>
    %cst_25 = arith.constant dense<0.000000e+00> : vector<8x32xf32>
    %85 = tpu.matmul %83, %84, %cst_25 {dimension_numbers = #tpu.dot_dimension_numbers<[1], [0], [0], [1], [0, 0, 1, 1], [], []>} : vector<8x32xbf16>, vector<32x32xbf16>, vector<8x32xf32> -> vector<8x32xf32>
    %86 = vector.extract_strided_slice %17 {offsets = [0, 96], sizes = [8, 32], strides = [1, 1]} : vector<8x128xbf16> to vector<8x32xbf16>
    %87 = vector.extract_strided_slice %19 {offsets = [0, 96], sizes = [32, 32], strides = [1, 1]} : vector<32x128xbf16> to vector<32x32xbf16>
    %cst_26 = arith.constant dense<0.000000e+00> : vector<8x32xf32>
    %88 = tpu.matmul %86, %87, %cst_26 {dimension_numbers = #tpu.dot_dimension_numbers<[1], [1], [0], [0], [0, 0, 1, 0], [], []>} : vector<8x32xbf16>, vector<32x32xbf16>, vector<8x32xf32> -> vector<8x32xf32>
    %cst_27 = arith.constant 0.176776692 : f32
    %89 = vector.broadcast %cst_27 : f32 to vector<8x32xf32>
    %90 = arith.mulf %88, %89 : vector<8x32xf32>
    %91 = vector.broadcast %9 : vector<1x32xf32> to vector<8x32xf32>
    %92 = arith.addf %90, %91 : vector<8x32xf32>
    %cst_28 = arith.constant dense<0xFF800000> : vector<8xf32>
    %93 = vector.multi_reduction <maximumf>, %92, %cst_28 [1] : vector<8x32xf32> to vector<8xf32>
    %94 = vector.shape_cast %93 : vector<8xf32> to vector<8x1xf32>
    %95 = vector.broadcast %94 : vector<8x1xf32> to vector<8x32xf32>
    %96 = arith.subf %92, %95 : vector<8x32xf32>
    %97 = math.exp %96 : vector<8x32xf32>
    %cst_29 = arith.constant dense<0.000000e+00> : vector<8xf32>
    %98 = vector.multi_reduction <add>, %97, %cst_29 [1] : vector<8x32xf32> to vector<8xf32>
    %99 = vector.shape_cast %98 : vector<8xf32> to vector<8x1xf32>
    %100 = tpu.reciprocal %99 {approx = true} : vector<8x1xf32> -> vector<8x1xf32>
    %101 = vector.broadcast %100 : vector<8x1xf32> to vector<8x32xf32>
    %102 = arith.mulf %97, %101 : vector<8x32xf32>
    %103 = arith.addf %82, %102 : vector<8x32xf32>
    %104 = arith.truncf %102 : vector<8x32xf32> to vector<8x32xbf16>
    %105 = vector.extract_strided_slice %21 {offsets = [0, 96], sizes = [32, 32], strides = [1, 1]} : vector<32x128xbf16> to vector<32x32xbf16>
    %cst_30 = arith.constant dense<0.000000e+00> : vector<8x32xf32>
    %106 = tpu.matmul %104, %105, %cst_30 {dimension_numbers = #tpu.dot_dimension_numbers<[1], [0], [0], [1], [0, 0, 1, 1], [], []>} : vector<8x32xbf16>, vector<32x32xbf16>, vector<8x32xf32> -> vector<8x32xf32>
    %107 = tpu.concatenate %43, %64, %85, %106 in 1 : vector<8x32xf32>, vector<8x32xf32>, vector<8x32xf32>, vector<8x32xf32> -> vector<8x128xf32>
    %108 = arith.truncf %107 : vector<8x128xf32> to vector<8x128xbf16>
    %c0_31 = arith.constant 0 : index
    %c0_32 = arith.constant 0 : index
    %109 = vector.load %arg5[%c0_31, %c0_32] : memref<128x128xbf16, #tpu.memory_space<vmem>>, vector<128x128xbf16>
    %cst_33 = arith.constant dense<0.000000e+00> : vector<8x128xf32>
    %110 = tpu.matmul %108, %109, %cst_33 {dimension_numbers = #tpu.dot_dimension_numbers<[1], [0], [0], [1], [0, 0, 1, 1], [], []>} : vector<8x128xbf16>, vector<128x128xbf16>, vector<8x128xf32> -> vector<8x128xf32>
    %c0_34 = arith.constant 0 : index
    %c0_35 = arith.constant 0 : index
    %111 = vector.load %arg6[%c0_34, %c0_35] : memref<1x128xf32, #tpu.memory_space<vmem>>, vector<1x128xf32>
    %112 = vector.broadcast %111 : vector<1x128xf32> to vector<8x128xf32>
    %113 = arith.addf %110, %112 : vector<8x128xf32>
    %114 = arith.addf %0, %113 : vector<8x128xf32>
    %c0_36 = arith.constant 0 : index
    %c0_37 = arith.constant 0 : index
    %115 = vector.load %arg7[%c0_36, %c0_37] : memref<1x128xf32, #tpu.memory_space<vmem>>, vector<1x128xf32>
    %c0_38 = arith.constant 0 : index
    %c0_39 = arith.constant 0 : index
    %116 = vector.load %arg8[%c0_38, %c0_39] : memref<1x128xf32, #tpu.memory_space<vmem>>, vector<1x128xf32>
    %cst_40 = arith.constant dense<0.000000e+00> : vector<8xf32>
    %117 = vector.multi_reduction <add>, %114, %cst_40 [1] : vector<8x128xf32> to vector<8xf32>
    %118 = vector.shape_cast %117 : vector<8xf32> to vector<8x1xf32>
    %cst_41 = arith.constant 1.280000e+02 : f32
    %119 = vector.broadcast %cst_41 : f32 to vector<8x1xf32>
    %120 = arith.divf %118, %119 : vector<8x1xf32>
    %121 = vector.broadcast %120 : vector<8x1xf32> to vector<8x128xf32>
    %122 = arith.subf %114, %121 : vector<8x128xf32>
    %123 = arith.mulf %122, %122 : vector<8x128xf32>
    %cst_42 = arith.constant dense<0.000000e+00> : vector<8xf32>
    %124 = vector.multi_reduction <add>, %123, %cst_42 [1] : vector<8x128xf32> to vector<8xf32>
    %125 = vector.shape_cast %124 : vector<8xf32> to vector<8x1xf32>
    %cst_43 = arith.constant 1.280000e+02 : f32
    %126 = vector.broadcast %cst_43 : f32 to vector<8x1xf32>
    %127 = arith.divf %125, %126 : vector<8x1xf32>
    %128 = vector.broadcast %120 : vector<8x1xf32> to vector<8x128xf32>
    %129 = arith.subf %114, %128 : vector<8x128xf32>
    %cst_44 = arith.constant 9.99999974E-6 : f32
    %130 = vector.broadcast %cst_44 : f32 to vector<8x1xf32>
    %131 = arith.addf %127, %130 : vector<8x1xf32>
    %132 = math.rsqrt %131 : vector<8x1xf32>
    %133 = vector.broadcast %132 : vector<8x1xf32> to vector<8x128xf32>
    %134 = arith.mulf %129, %133 : vector<8x128xf32>
    %135 = vector.broadcast %115 : vector<1x128xf32> to vector<8x128xf32>
    %136 = arith.mulf %134, %135 : vector<8x128xf32>
    %137 = vector.broadcast %116 : vector<1x128xf32> to vector<8x128xf32>
    %138 = arith.addf %136, %137 : vector<8x128xf32>
    %139 = arith.truncf %138 : vector<8x128xf32> to vector<8x128xbf16>
    %c0_45 = arith.constant 0 : index
    %c0_46 = arith.constant 0 : index
    %140 = vector.load %arg11[%c0_45, %c0_46] : memref<128x512xbf16, #tpu.memory_space<vmem>>, vector<128x512xbf16>
    %cst_47 = arith.constant dense<0.000000e+00> : vector<8x512xf32>
    %141 = tpu.matmul %139, %140, %cst_47 {dimension_numbers = #tpu.dot_dimension_numbers<[1], [0], [0], [1], [0, 0, 1, 1], [], []>} : vector<8x128xbf16>, vector<128x512xbf16>, vector<8x512xf32> -> vector<8x512xf32>
    %c0_48 = arith.constant 0 : index
    %c0_49 = arith.constant 0 : index
    %142 = vector.load %arg12[%c0_48, %c0_49] : memref<1x512xf32, #tpu.memory_space<vmem>>, vector<1x512xf32>
    %143 = vector.broadcast %142 : vector<1x512xf32> to vector<8x512xf32>
    %144 = arith.addf %141, %143 : vector<8x512xf32>
    %cst_50 = arith.constant 0.000000e+00 : f32
    %145 = vector.broadcast %cst_50 : f32 to vector<8x512xf32>
    %146 = arith.maximumf %144, %145 : vector<8x512xf32>
    %147 = arith.truncf %146 : vector<8x512xf32> to vector<8x512xbf16>
    %c0_51 = arith.constant 0 : index
    %c0_52 = arith.constant 0 : index
    %148 = vector.load %arg13[%c0_51, %c0_52] : memref<512x128xbf16, #tpu.memory_space<vmem>>, vector<512x128xbf16>
    %cst_53 = arith.constant dense<0.000000e+00> : vector<8x128xf32>
    %149 = tpu.matmul %147, %148, %cst_53 {dimension_numbers = #tpu.dot_dimension_numbers<[1], [0], [0], [1], [0, 0, 1, 1], [], []>} : vector<8x512xbf16>, vector<512x128xbf16>, vector<8x128xf32> -> vector<8x128xf32>
    %c0_54 = arith.constant 0 : index
    %c0_55 = arith.constant 0 : index
    %150 = vector.load %arg14[%c0_54, %c0_55] : memref<1x128xf32, #tpu.memory_space<vmem>>, vector<1x128xf32>
    %151 = vector.broadcast %150 : vector<1x128xf32> to vector<8x128xf32>
    %152 = arith.addf %149, %151 : vector<8x128xf32>
    %153 = arith.addf %138, %152 : vector<8x128xf32>
    %c0_56 = arith.constant 0 : index
    %c0_57 = arith.constant 0 : index
    %154 = vector.load %arg9[%c0_56, %c0_57] : memref<1x128xf32, #tpu.memory_space<vmem>>, vector<1x128xf32>
    %c0_58 = arith.constant 0 : index
    %c0_59 = arith.constant 0 : index
    %155 = vector.load %arg10[%c0_58, %c0_59] : memref<1x128xf32, #tpu.memory_space<vmem>>, vector<1x128xf32>
    %cst_60 = arith.constant dense<0.000000e+00> : vector<8xf32>
    %156 = vector.multi_reduction <add>, %153, %cst_60 [1] : vector<8x128xf32> to vector<8xf32>
    %157 = vector.shape_cast %156 : vector<8xf32> to vector<8x1xf32>
    %cst_61 = arith.constant 1.280000e+02 : f32
    %158 = vector.broadcast %cst_61 : f32 to vector<8x1xf32>
    %159 = arith.divf %157, %158 : vector<8x1xf32>
    %160 = vector.broadcast %159 : vector<8x1xf32> to vector<8x128xf32>
    %161 = arith.subf %153, %160 : vector<8x128xf32>
    %162 = arith.mulf %161, %161 : vector<8x128xf32>
    %cst_62 = arith.constant dense<0.000000e+00> : vector<8xf32>
    %163 = vector.multi_reduction <add>, %162, %cst_62 [1] : vector<8x128xf32> to vector<8xf32>
    %164 = vector.shape_cast %163 : vector<8xf32> to vector<8x1xf32>
    %cst_63 = arith.constant 1.280000e+02 : f32
    %165 = vector.broadcast %cst_63 : f32 to vector<8x1xf32>
    %166 = arith.divf %164, %165 : vector<8x1xf32>
    %167 = vector.broadcast %159 : vector<8x1xf32> to vector<8x128xf32>
    %168 = arith.subf %153, %167 : vector<8x128xf32>
    %cst_64 = arith.constant 9.99999974E-6 : f32
    %169 = vector.broadcast %cst_64 : f32 to vector<8x1xf32>
    %170 = arith.addf %166, %169 : vector<8x1xf32>
    %171 = math.rsqrt %170 : vector<8x1xf32>
    %172 = vector.broadcast %171 : vector<8x1xf32> to vector<8x128xf32>
    %173 = arith.mulf %168, %172 : vector<8x128xf32>
    %174 = vector.broadcast %154 : vector<1x128xf32> to vector<8x128xf32>
    %175 = arith.mulf %173, %174 : vector<8x128xf32>
    %176 = vector.broadcast %155 : vector<1x128xf32> to vector<8x128xf32>
    %177 = arith.addf %175, %176 : vector<8x128xf32>
    %c0_65 = arith.constant 0 : index
    %c0_66 = arith.constant 0 : index
    %178 = vector.load %arg15[%c0_65, %c0_66] : memref<8x128xf32, #tpu.memory_space<vmem>>, vector<8x128xf32>
    tpu.vector_store %arg15[%c0_65, %c0_66], %177 {strides = array<i32>} : memref<8x128xf32, #tpu.memory_space<vmem>>, vector<8x128xf32>,
    %cst_67 = arith.constant 2.500000e-01 : f32
    %179 = vector.broadcast %cst_67 : f32 to vector<8x32xf32>
    %180 = arith.mulf %103, %179 : vector<8x32xf32>
    %cst_68 = arith.constant 9.99999993E-9 : f32
    %181 = vector.broadcast %cst_68 : f32 to vector<8x32xf32>
    %182 = arith.addf %180, %181 : vector<8x32xf32>
    %183 = math.log %182 : vector<8x32xf32>
    %184 = arith.mulf %180, %183 : vector<8x32xf32>
    %cst_69 = arith.constant dense<0.000000e+00> : vector<8xf32>
    %185 = vector.multi_reduction <add>, %184, %cst_69 [1] : vector<8x32xf32> to vector<8xf32>
    %186 = vector.shape_cast %185 : vector<8xf32> to vector<8x1xf32>
    %cst_70 = arith.constant 0.000000e+00 : f32
    %187 = vector.broadcast %cst_70 : f32 to vector<8x1xf32>
    %188 = arith.subf %187, %186 : vector<8x1xf32>
    %189 = vector.shape_cast %188 : vector<8x1xf32> to vector<8x1xf32>
    %190 = vector.broadcast %189 : vector<8x1xf32> to vector<8x128xf32>
    %c0_71 = arith.constant 0 : index
    %c0_72 = arith.constant 0 : index
    %191 = vector.load %arg16[%c0_71, %c0_72] : memref<8x128xf32, #tpu.memory_space<vmem>>, vector<8x128xf32>
    tpu.vector_store %arg16[%c0_71, %c0_72], %190 {strides = array<i32>} : memref<8x128xf32, #tpu.memory_space<vmem>>, vector<8x128xf32>,
    return
  }
}

</mosaic_0001>

<llo_original>
// kernel: step.1
$region0: #{step.1}
  #allocation0 [shape = 'u32[]', space=smem, size = 0x4, offset = 0x4, fixed_abs, tag = 'smem constant byte address 0x4 - core index']
  #allocation1 [shape = 'u32[144,128]{1,0:T(1,128)}', space=vmem, size = 0x12000, scoped, tag = 'internal scratch']
  #allocation2 [shape = 's32[1]{0:T(128)S(6)}', space=smem, size = 0x200, scoped, tag = 'scoped memory for step.1']
  %s0 = inlined_call_operand.<no memory space> [shape: s32[1], index: 0, kind: input, shape index: {}]
  %s1 = inlined_call_operand.hbm [shape: f32[8,128], index: 1, kind: input, shape index: {}]
  %s2 = inlined_call_operand.vmem [shape: f32[24,128], index: 2, kind: input, shape index: {}]
  %s3 = inlined_call_operand.hbm [shape: bf16[128,384], index: 3, kind: input, shape index: {}]
  %s4 = inlined_call_operand.vmem [shape: f32[1,384], index: 4, kind: input, shape index: {}]
  %s5 = inlined_call_operand.vmem [shape: bf16[128,128], index: 5, kind: input, shape index: {}]
  %s6 = inlined_call_operand.vmem [shape: f32[1,128], index: 6, kind: input, shape index: {}]
  %s7 = inlined_call_operand.vmem [shape: f32[1,128], index: 7, kind: input, shape index: {}]
  %s8 = inlined_call_operand.vmem [shape: f32[1,128], index: 8, kind: input, shape index: {}]
  %s9 = inlined_call_operand.hbm [shape: f32[1,128], index: 9, kind: input, shape index: {}]
  %s10 = inlined_call_operand.vmem [shape: f32[1,128], index: 10, kind: input, shape index: {}]
  %s11 = inlined_call_operand.hbm [shape: bf16[128,512], index: 11, kind: input, shape index: {}]
  %s12 = inlined_call_operand.vmem [shape: f32[1,512], index: 12, kind: input, shape index: {}]
  %s13 = inlined_call_operand.hbm [shape: bf16[512,128], index: 13, kind: input, shape index: {}]
  %s14 = inlined_call_operand.vmem [shape: f32[1,128], index: 14, kind: input, shape index: {}]
  %s15 = inlined_call_operand.hbm [shape: f32[8,128], index: 15, kind: output, shape index: {0}]
  %s16 = inlined_call_operand.vmem [shape: f32[8,128], index: 16, kind: output, shape index: {1}]
  %17 = xla_tuple %s15, %s16
  %s18 = sld [smem:[#allocation0]]
  $region98: #{step.1} parent=0
    _
  %s20 = ssub.s32 1, %s18
  %s21 = scalar_select 0, %s20, %s18
  %22 = sst [smem:[#allocation2]] %s0
  $region1: #{step.1} parent=0
    #allocation3 [shape = 'u8[4096]{0}', space=vmem, size = 0x1000, scoped, tag = 'input window, operand 1, single buffered']
    #allocation4 [shape = 's32[1]{0}', space=sflag, size = 0x4, scoped, tag = 'scoped memory for step.1']
    #allocation5 [shape = 's32[1]{0}', space=sflag, size = 0x4, scoped, tag = 'scoped memory for step.1']
    #allocation6 [shape = 'u8[98304]{0}', space=vmem, size = 0x18000, scoped, tag = 'input window, operand 3, single buffered']
    #allocation7 [shape = 's32[1]{0}', space=sflag, size = 0x4, scoped, tag = 'scoped memory for step.1']
    #allocation8 [shape = 'u8[512]{0}', space=vmem, size = 0x400, scoped, tag = 'input window, operand 9, single buffered']
    #allocation9 [shape = 'u8[131072]{0}', space=vmem, size = 0x20000, scoped, tag = 'input window, operand 11, single buffered']
    #allocation10 [shape = 's32[1]{0}', space=sflag, size = 0x4, scoped, tag = 'scoped memory for step.1']
    #allocation11 [shape = 'u8[131072]{0}', space=vmem, size = 0x20000, scoped, tag = 'input window, operand 13, single buffered']
    #allocation12 [shape = 'u8[4096]{0}', space=vmem, size = 0x1000, scoped, tag = 'output window, operand 0, single buffered']
    %23 = vsyncpa [#allocation4], 0
    %24 = vsyncpa [#allocation7], 0
    %25 = vsyncpa [#allocation10], 0
    %26 = vsyncpa [#allocation5], 0
    // Predicated region
    $region2: #{step.1} parent=1 // pred_check
      _
    $region3: #{step.1} parent=1 // pred_check_branch
      %28 = sbr.rel (0) target = $region5
    $region4: #{step.1} parent=1 // pred_region
      _
    $region5: #{step.1} parent=1 // pred_fallthru
      _
    // Predicated region
    $region6: #{step.1} parent=1 // pred_check
      _
    $region7: #{step.1} parent=1 // pred_check_branch
      %30 = sbr.rel (0) target = $region9
    $region8: #{step.1} parent=1 // pred_region
      %s32 = ssub.s32 128, 128
      %33 = vsyncadd [#allocation4], %s32
      %s35 = sshll.u32 [#allocation3], 4
      %s36 = int_to_ptr.vmem [resolvable:$true] %s35
      %38 = dma.hbm_to_vmem [thread:$0]  %s1, 128, %s36, [#allocation4]
    $region9: #{step.1} parent=1 // pred_fallthru
      _
    // Predicated region
    $region10: #{step.1} parent=1 // pred_check
      _
    $region11: #{step.1} parent=1 // pred_check_branch
      %40 = sbr.rel (0) target = $region13
    $region12: #{step.1} parent=1 // pred_region
      _
    $region13: #{step.1} parent=1 // pred_fallthru
      _
    // Predicated region
    $region14: #{step.1} parent=1 // pred_check
      _
    $region15: #{step.1} parent=1 // pred_check_branch
      %42 = sbr.rel (0) target = $region17
    $region16: #{step.1} parent=1 // pred_region
      %s44 = ssub.s32 3072, 3072
      %45 = vsyncadd [#allocation7], %s44
      %s46 = sshll.u32 [#allocation6], 4
      %s47 = int_to_ptr.vmem [resolvable:$true] %s46
      %52 = dma.hbm_to_vmem [thread:$0]  %s3, 3072, %s47, [#allocation7], 192, 192, 12
    $region17: #{step.1} parent=1 // pred_fallthru
      _
    // Predicated region
    $region18: #{step.1} parent=1 // pred_check
      _
    $region19: #{step.1} parent=1 // pred_check_branch
      %54 = sbr.rel (0) target = $region21
    $region20: #{step.1} parent=1 // pred_region
      _
    $region21: #{step.1} parent=1 // pred_fallthru
      _
    // Predicated region
    $region22: #{step.1} parent=1 // pred_check
      _
    $region23: #{step.1} parent=1 // pred_check_branch
      %56 = sbr.rel (0) target = $region25
    $region24: #{step.1} parent=1 // pred_region
      _
    $region25: #{step.1} parent=1 // pred_fallthru
      _
    // Predicated region
    $region26: #{step.1} parent=1 // pred_check
      _
    $region27: #{step.1} parent=1 // pred_check_branch
      %58 = sbr.rel (0) target = $region29
    $region28: #{step.1} parent=1 // pred_region
      _
    $region29: #{step.1} parent=1 // pred_fallthru
      _
    // Predicated region
    $region30: #{step.1} parent=1 // pred_check
      _
    $region31: #{step.1} parent=1 // pred_check_branch
      %60 = sbr.rel (0) target = $region33
    $region32: #{step.1} parent=1 // pred_region
      _
    $region33: #{step.1} parent=1 // pred_fallthru
      _
    // Predicated region
    $region34: #{step.1} parent=1 // pred_check
      _
    $region35: #{step.1} parent=1 // pred_check_branch
      %62 = sbr.rel (0) target = $region37
    $region36: #{step.1} parent=1 // pred_region
      _
    $region37: #{step.1} parent=1 // pred_fallthru
      _
    // Predicated region
    $region38: #{step.1} parent=1 // pred_check
      _
    $region39: #{step.1} parent=1 // pred_check_branch
      %64 = sbr.rel (0) target = $region41
    $region40: #{step.1} parent=1 // pred_region
      %s66 = ssub.s32 16, 16
      %67 = vsyncadd [#allocation7], %s66
      %s69 = sshll.u32 [#allocation8], 4
      %s70 = int_to_ptr.vmem [resolvable:$true] %s69
      %72 = dma.hbm_to_vmem [thread:$0]  %s9, 16, %s70, [#allocation7]
    $region41: #{step.1} parent=1 // pred_fallthru
      _
    // Predicated region
    $region42: #{step.1} parent=1 // pred_check
      _
    $region43: #{step.1} parent=1 // pred_check_branch
      %74 = sbr.rel (0) target = $region45
    $region44: #{step.1} parent=1 // pred_region
      _
    $region45: #{step.1} parent=1 // pred_fallthru
      _
    // Predicated region
    $region46: #{step.1} parent=1 // pred_check
      _
    $region47: #{step.1} parent=1 // pred_check_branch
      %76 = sbr.rel (0) target = $region49
    $region48: #{step.1} parent=1 // pred_region
      %s78 = ssub.s32 4096, 4096
      %79 = vsyncadd [#allocation10], %s78
      %s80 = sshll.u32 [#allocation9], 4
      %s81 = int_to_ptr.vmem [resolvable:$true] %s80
      %86 = dma.hbm_to_vmem [thread:$0]  %s11, 4096, %s81, [#allocation10], 256, 256, 16
    $region49: #{step.1} parent=1 // pred_fallthru
      _
    // Predicated region
    $region50: #{step.1} parent=1 // pred_check
      _
    $region51: #{step.1} parent=1 // pred_check_branch
      %88 = sbr.rel (0) target = $region53
    $region52: #{step.1} parent=1 // pred_region
      _
    $region53: #{step.1} parent=1 // pred_fallthru
      _
    // Predicated region
    $region54: #{step.1} parent=1 // pred_check
      _
    $region55: #{step.1} parent=1 // pred_check_branch
      %90 = sbr.rel (0) target = $region57
    $region56: #{step.1} parent=1 // pred_region
      %s92 = ssub.s32 4096, 4096
      %93 = vsyncadd [#allocation10], %s92
      %s94 = sshll.u32 [#allocation11], 4
      %s95 = int_to_ptr.vmem [resolvable:$true] %s94
      %100 = dma.hbm_to_vmem [thread:$0]  %s13, 4096, %s95, [#allocation10], 64, 64, 4
    $region57: #{step.1} parent=1 // pred_fallthru
      _
    // Predicated region
    $region58: #{step.1} parent=1 // pred_check
      _
    $region59: #{step.1} parent=1 // pred_check_branch
      %102 = sbr.rel (0) target = $region61
    $region60: #{step.1} parent=1 // pred_region
      _
    $region61: #{step.1} parent=1 // pred_fallthru
      _
    // Predicated region
    $region62: #{step.1} parent=1 // pred_check
      _
    $region63: #{step.1} parent=1 // pred_check_branch
      %104 = sbr.rel (0) target = $region65
    $region64: #{step.1} parent=1 // pred_region
      %105 = dma.done [#allocation4], 128
    $region65: #{step.1} parent=1 // pred_fallthru
      _
    // Predicated region
    $region66: #{step.1} parent=1 // pred_check
      _
    $region67: #{step.1} parent=1 // pred_check_branch
      %107 = sbr.rel (0) target = $region69
    $region68: #{step.1} parent=1 // pred_region
      %108 = dma.done [#allocation7], 3072
    $region69: #{step.1} parent=1 // pred_fallthru
      _
    // Predicated region
    $region70: #{step.1} parent=1 // pred_check
      _
    $region71: #{step.1} parent=1 // pred_check_branch
      %110 = sbr.rel (0) target = $region73
    $region72: #{step.1} parent=1 // pred_region
      %111 = dma.done [#allocation7], 16
    $region73: #{step.1} parent=1 // pred_fallthru
      _
    // Predicated region
    $region74: #{step.1} parent=1 // pred_check
      _
    $region75: #{step.1} parent=1 // pred_check_branch
      %113 = sbr.rel (0) target = $region77
    $region76: #{step.1} parent=1 // pred_region
      %114 = dma.done [#allocation10], 4096
    $region77: #{step.1} parent=1 // pred_fallthru
      _
    // Predicated region
    $region78: #{step.1} parent=1 // pred_check
      _
    $region79: #{step.1} parent=1 // pred_check_branch
      %116 = sbr.rel (0) target = $region81
    $region80: #{step.1} parent=1 // pred_region
      %117 = dma.done [#allocation10], 4096
    $region81: #{step.1} parent=1 // pred_fallthru
      _
    %v119 = vld [vmem:[#allocation3] sm:$0xff]
    %v120 = vld [vmem:[%s2] sm:$0xff]
    %v121 = vld [vmem:[%s2 + $0x8] sm:$0xff]
    %v122 = vld [vmem:[%s2 + $0x10] sm:$0xff]
    %s123 = sld [smem:[#allocation2]]
    %v124 = vlaneseq
    %v125 = vand.u32 %v124, 127
    %v126 = vstv %s123
    %vm127 = vcmp.lt.s32.totalorder %v125, %v126
    %v128 = vsel %vm127, 0.0, -1e+30
    %v129 = vpack.c.bf16 %v120, %v119
    %v130 = vpack.c.bf16 %v122, %v121
    %v131 = vld [vmem:[#allocation6] sm:$0xff]
    %v132 = vld [vmem:[#allocation6 + $0x8] sm:$0xf]
    %v133 = vld [vmem:[#allocation6 + $0xc] sm:$0xff]
    %v134 = vld [vmem:[#allocation6 + $0x14] sm:$0xf]
    %v135 = vld [vmem:[#allocation6 + $0x18] sm:$0xff]
    %v136 = vld [vmem:[#allocation6 + $0x20] sm:$0xf]
    %v137 = vld [vmem:[#allocation6 + $0x24] sm:$0xff]
    %v138 = vld [vmem:[#allocation6 + $0x2c] sm:$0xf]
    %v139 = vld [vmem:[#allocation6 + $0x30] sm:$0xff]
    %v140 = vld [vmem:[#allocation6 + $0x38] sm:$0xf]
    %v141 = vld [vmem:[#allocation6 + $0x3c] sm:$0xff]
    %v142 = vld [vmem:[#allocation6 + $0x44] sm:$0xf]
    %v143 = vld [vmem:[#allocation6 + $0x48] sm:$0xff]
    %v144 = vld [vmem:[#allocation6 + $0x50] sm:$0xf]
    %v145 = vld [vmem:[#allocation6 + $0x54] sm:$0xff]
    %v146 = vld [vmem:[#allocation6 + $0x5c] sm:$0xf]
    %v147 = vld [vmem:[#allocation6 + $0x60] sm:$0xff]
    %v148 = vld [vmem:[#allocation6 + $0x68] sm:$0xf]
    %v149 = vld [vmem:[#allocation6 + $0x6c] sm:$0xff]
    %v150 = vld [vmem:[#allocation6 + $0x74] sm:$0xf]
    %v151 = vld [vmem:[#allocation6 + $0x78] sm:$0xff]
    %v152 = vld [vmem:[#allocation6 + $0x80] sm:$0xf]
    %v153 = vld [vmem:[#allocation6 + $0x84] sm:$0xff]
    %v154 = vld [vmem:[#allocation6 + $0x8c] sm:$0xf]
    %v155 = vld [vmem:[#allocation6 + $0x90] sm:$0xff]
    %v156 = vld [vmem:[#allocation6 + $0x98] sm:$0xf]
    %v157 = vld [vmem:[#allocation6 + $0x9c] sm:$0xff]
    %v158 = vld [vmem:[#allocation6 + $0xa4] sm:$0xf]
    %v159 = vld [vmem:[#allocation6 + $0xa8] sm:$0xff]
    %v160 = vld [vmem:[#allocation6 + $0xb0] sm:$0xf]
    %v161 = vld [vmem:[#allocation6 + $0xb4] sm:$0xff]
    %v162 = vld [vmem:[#allocation6 + $0xbc] sm:$0xf]
    %v163 = vld [vmem:[%s4] sm:$0x7]
    %v165 = vlaneseq
    %v166 = vshrl.u32 %v165, 7
    %v167 = vsub.s32 0, %v166
    %v168 = vrot.slane %v163, %v167
    %v169 = vlaneseq
    %v170 = vshrl.u32 %v169, 7
    %v171 = vsub.s32 1, %v170
    %v172 = vrot.slane %v163, %v171
    %v173 = vlaneseq
    %v174 = vshrl.u32 %v173, 7
    %v175 = vsub.s32 2, %v174
    %v176 = vrot.slane %v163, %v175
    %v212 = vunpack.c.l.b16 %v131
    %v213 = vunpack.c.h.b16 %v131
    %v214 = vunpack.c.l.b16 %v132
    %v215 = vunpack.c.l.b16 %v133
    %v216 = vunpack.c.h.b16 %v133
    %v217 = vunpack.c.l.b16 %v134
    %v218 = vunpack.c.l.b16 %v135
    %v219 = vunpack.c.h.b16 %v135
    %v220 = vunpack.c.l.b16 %v136
    %v221 = vunpack.c.l.b16 %v137
    %v222 = vunpack.c.h.b16 %v137
    %v223 = vunpack.c.l.b16 %v138
    %v224 = vunpack.c.l.b16 %v139
    %v225 = vunpack.c.h.b16 %v139
    %v226 = vunpack.c.l.b16 %v140
    %v227 = vunpack.c.l.b16 %v141
    %v228 = vunpack.c.h.b16 %v141
    %v229 = vunpack.c.l.b16 %v142
    %v230 = vunpack.c.l.b16 %v143
    %v231 = vunpack.c.h.b16 %v143
    %v232 = vunpack.c.l.b16 %v144
    %v233 = vunpack.c.l.b16 %v145
    %v234 = vunpack.c.h.b16 %v145
    %v235 = vunpack.c.l.b16 %v146
    %v236 = vunpack.c.l.b16 %v147
    %v237 = vunpack.c.h.b16 %v147
    %v238 = vunpack.c.l.b16 %v148
    %v239 = vunpack.c.l.b16 %v149
    %v240 = vunpack.c.h.b16 %v149
    %v241 = vunpack.c.l.b16 %v150
    %v242 = vunpack.c.l.b16 %v151
    %v243 = vunpack.c.h.b16 %v151
    %v244 = vunpack.c.l.b16 %v152
    %v245 = vunpack.c.l.b16 %v153
    %v246 = vunpack.c.h.b16 %v153
    %v247 = vunpack.c.l.b16 %v154
    %v248 = vunpack.c.l.b16 %v155
    %v249 = vunpack.c.h.b16 %v155
    %v250 = vunpack.c.l.b16 %v156
    %v251 = vunpack.c.l.b16 %v157
    %v252 = vunpack.c.h.b16 %v157
    %v253 = vunpack.c.l.b16 %v158
    %v254 = vunpack.c.l.b16 %v159
    %v255 = vunpack.c.h.b16 %v159
    %v256 = vunpack.c.l.b16 %v160
    %v257 = vunpack.c.l.b16 %v161
    %v258 = vunpack.c.h.b16 %v161
    %v259 = vunpack.c.l.b16 %v162
    %v260 = vpack.c.b16 %v215, %v212
    %v261 = vpack.c.b16 %v216, %v213
    %v262 = vpack.c.b16 %v217, %v214
    %v263 = vpack.c.b16 %v221, %v218
    %v264 = vpack.c.b16 %v222, %v219
    %v265 = vpack.c.b16 %v223, %v220
    %v266 = vpack.c.b16 %v227, %v224
    %v267 = vpack.c.b16 %v228, %v225
    %v268 = vpack.c.b16 %v229, %v226
    %v269 = vpack.c.b16 %v233, %v230
    %v270 = vpack.c.b16 %v234, %v231
    %v271 = vpack.c.b16 %v235, %v232
    %v272 = vpack.c.b16 %v239, %v236
    %v273 = vpack.c.b16 %v240, %v237
    %v274 = vpack.c.b16 %v241, %v238
    %v275 = vpack.c.b16 %v245, %v242
    %v276 = vpack.c.b16 %v246, %v243
    %v277 = vpack.c.b16 %v247, %v244
    %v278 = vpack.c.b16 %v251, %v248
    %v279 = vpack.c.b16 %v252, %v249
    %v280 = vpack.c.b16 %v253, %v250
    %v281 = vpack.c.b16 %v257, %v254
    %v282 = vpack.c.b16 %v258, %v255
    %v283 = vpack.c.b16 %v259, %v256
    %308 = vmatprep.subr.bf16.mxu0 %v282
    %309 = vmatpush1.bf16.msra.mxu0 %v281
    %310 = vmatprep.subr.bf16.mxu0 %v279
    %311 = vmatpush1.bf16.msra.mxu0 %v278
    %312 = vmatprep.subr.bf16.mxu0 %v276
    %313 = vmatpush1.bf16.msra.mxu0 %v275
    %314 = vmatprep.subr.bf16.mxu0 %v273
    %315 = vmatpush1.bf16.msra.mxu0 %v272
    %316 = vmatprep.subr.bf16.mxu0 %v270
    %317 = vmatpush1.bf16.msra.mxu0 %v269
    %318 = vmatprep.subr.bf16.mxu0 %v267
    %319 = vmatpush1.bf16.msra.mxu0 %v266
    %320 = vmatprep.subr.bf16.mxu0 %v264
    %321 = vmatpush1.bf16.msra.mxu0 %v263
    %322 = vmatprep.subr.bf16.mxu0 %v261
    %323 = vmatpush1.bf16.msra.mxu0 %v260
    %324 = vmatprep.subr.bf16.mxu0 0
    %325 = vmatpush2.bf16.msra.mxu0 0
    %326 = vmatprep.subr.bf16.mxu0 0
    %327 = vmatpush2.bf16.msra.mxu0 0
    %328 = vmatprep.subr.bf16.mxu0 0
    %329 = vmatpush2.bf16.msra.mxu0 0
    %330 = vmatprep.subr.bf16.mxu0 0
    %331 = vmatpush2.bf16.msra.mxu0 0
    %332 = vmatprep.subr.bf16.mxu0 0
    %333 = vmatpush2.bf16.msra.mxu0 0
    %334 = vmatprep.subr.bf16.mxu0 0
    %335 = vmatpush2.bf16.msra.mxu0 0
    %336 = vmatprep.subr.bf16.mxu0 0
    %337 = vmatpush2.bf16.msra.mxu0 0
    %338 = vmatprep.subr.bf16.mxu0 0
    %339 = vmatpush2.bf16.msra.mxu0 0
    %340 = vmatprep.mubr.bf16.mxu0 0
    %341 = vmatmul.mubr.bf16.gmra.mxu0 %v129
    %v342 = vpop.f32.mrf.mxu0
    %v343 = vadd.f32 %v168, %v342
    %v344 = vpop.f32.mrf.mxu0
    %v345 = vadd.f32 %v172, %v344
    %v346 = vpop.f32.mrf.mxu0
    %v347 = vpop.f32.mrf.mxu0
    %v348 = vadd.f32 %v172, %v347
    %349 = vmatprep.mubr.bf16.mxu0 0
    %350 = vmatmul.mubr.bf16.gmra.mxu0 %v130
    %v351 = vpop.f32.mrf.mxu0
    %v352 = vpop.f32.mrf.mxu0
    %v353 = vadd.f32 %v172, %v352
    %v354 = vpop.f32.mrf.mxu0
    %v355 = vpop.f32.mrf.mxu0
    %v356 = vadd.f32 %v172, %v355
    %357 = vdwg.mxu0
    %358 = vmatprep.subr.bf16.mxu0 0
    %359 = vmatpush1.bf16.msra.mxu0 %v283
    %360 = vmatprep.subr.bf16.mxu0 0
    %361 = vmatpush1.bf16.msra.mxu0 %v280
    %362 = vmatprep.subr.bf16.mxu0 0
    %363 = vmatpush1.bf16.msra.mxu0 %v277
    %364 = vmatprep.subr.bf16.mxu0 0
    %365 = vmatpush1.bf16.msra.mxu0 %v274
    %366 = vmatprep.subr.bf16.mxu0 0
    %367 = vmatpush1.bf16.msra.mxu0 %v271
    %368 = vmatprep.subr.bf16.mxu0 0
    %369 = vmatpush1.bf16.msra.mxu0 %v268
    %370 = vmatprep.subr.bf16.mxu0 0
    %371 = vmatpush1.bf16.msra.mxu0 %v265
    %372 = vmatprep.subr.bf16.mxu0 0
    %373 = vmatpush1.bf16.msra.mxu0 %v262
    %374 = vmatprep.subr.bf16.mxu0 0
    %375 = vmatpush2.bf16.msra.mxu0 0
    %376 = vmatprep.subr.bf16.mxu0 0
    %377 = vmatpush2.bf16.msra.mxu0 0
    %378 = vmatprep.subr.bf16.mxu0 0
    %379 = vmatpush2.bf16.msra.mxu0 0
    %380 = vmatprep.subr.bf16.mxu0 0
    %381 = vmatpush2.bf16.msra.mxu0 0
    %382 = vmatprep.subr.bf16.mxu0 0
    %383 = vmatpush2.bf16.msra.mxu0 0
    %384 = vmatprep.subr.bf16.mxu0 0
    %385 = vmatpush2.bf16.msra.mxu0 0
    %386 = vmatprep.subr.bf16.mxu0 0
    %387 = vmatpush2.bf16.msra.mxu0 0
    %388 = vmatprep.subr.bf16.mxu0 0
    %389 = vmatpush2.bf16.msra.mxu0 0
    %390 = vmatprep.mubr.bf16.mxu0 0
    %391 = vmatmul.mubr.bf16.gmra.mxu0 %v129
    %v392 = vpop.f32.mrf.mxu0
    %v393 = vadd.f32 %v176, %v392
    %v394 = vpop.f32.mrf.mxu0
    %v395 = vpop.f32.mrf.mxu0
    %v396 = vadd.f32 %v176, %v395
    %v397 = vpop.f32.mrf.mxu0
    %398 = vmatprep.mubr.bf16.mxu0 0
    %399 = vmatmul.mubr.bf16.gmra.mxu0 %v130
    %v400 = vpop.f32.mrf.mxu0
    %v401 = vadd.f32 %v176, %v400
    %v402 = vpop.f32.mrf.mxu0
    %v403 = vpop.f32.mrf.mxu0
    %v404 = vadd.f32 %v176, %v403
    %v405 = vpop.f32.mrf.mxu0
    %406 = vdwg.mxu0
    %v407 = vpack.c.bf16 %v343, %v343
    %v408 = vpack.c.bf16 %v348, %v345
    %v409 = vpack.c.bf16 %v356, %v353
    %v410 = vpack.c.bf16 %v396, %v393
    %v411 = vpack.c.bf16 %v404, %v401
    %vm412 = vcmask 261120
    %v414 = vsel %vm412, %v407, 0
    %v417 = vsel %vm412, %v408, 0
    %v420 = vsel %vm412, %v409, 0
    %422 = vmatprep.subr.bf16.mxu0 0
    %423 = vmatpush1.bf16.xpose.msra.mxu0 0
    %424 = vmatprep.subr.bf16.mxu0 0
    %425 = vmatpush1.bf16.xpose.msra.mxu0 0
    %426 = vmatprep.subr.bf16.mxu0 0
    %427 = vmatpush1.bf16.xpose.msra.mxu0 0
    %428 = vmatprep.subr.bf16.mxu0 0
    %429 = vmatpush1.bf16.xpose.msra.mxu0 0
    %430 = vmatprep.subr.bf16.mxu0 0
    %431 = vmatpush1.bf16.xpose.msra.mxu0 0
    %432 = vmatprep.subr.bf16.mxu0 0
    %433 = vmatpush1.bf16.xpose.msra.mxu0 0
    %434 = vmatprep.subr.bf16.mxu0 0
    %435 = vmatpush1.bf16.xpose.msra.mxu0 %v420
    %436 = vmatprep.subr.bf16.mxu0 0
    %437 = vmatpush1.bf16.xpose.msra.mxu0 %v417
    %438 = vmatprep.subr.bf16.mxu0 0
    %439 = vmatpush2.bf16.xpose.msra.mxu0 0
    %440 = vmatprep.subr.bf16.mxu0 0
    %441 = vmatpush2.bf16.xpose.msra.mxu0 0
    %442 = vmatprep.subr.bf16.mxu0 0
    %443 = vmatpush2.bf16.xpose.msra.mxu0 0
    %444 = vmatprep.subr.bf16.mxu0 0
    %445 = vmatpush2.bf16.xpose.msra.mxu0 0
    %446 = vmatprep.subr.bf16.mxu0 0
    %447 = vmatpush2.bf16.xpose.msra.mxu0 0
    %448 = vmatprep.subr.bf16.mxu0 0
    %449 = vmatpush2.bf16.xpose.msra.mxu0 0
    %450 = vmatprep.subr.bf16.mxu0 0
    %451 = vmatpush2.bf16.xpose.msra.mxu0 0
    %452 = vmatprep.subr.bf16.mxu0 0
    %453 = vmatpush2.bf16.xpose.msra.mxu0 0
    %454 = vmatprep.mubr.bf16.mxu0 0
    %455 = vmatmul.mubr.bf16.gmra.mxu0 %v414
    %v456 = vpop.f32.mrf.mxu0
    %v457 = vadd.f32 0.0, %v456
    %v458 = vpop.f32.mrf.mxu0
    %v459 = vpop.f32.mrf.mxu0
    %v460 = vpop.f32.mrf.mxu0
    %461 = vdwg.mxu0
    %v462 = vmul.f32 %v457, 0.17677669
    %v463 = vadd.f32 %v462, %v128
    %v464 = vsel %vm412, %v463, -inf
    %465 = vmax.xlane.f32.xlu0 %v464
    %v466 = vpop.xlane.xlu0 %465
    %v467 = vsub.f32 %v463, %v466
    %v468 = vmul.f32 %v467, 1.442695
    %v469 = vpow.pop %v468
    %v470 = vsel %vm412, %v469, 0.0
    %471 = vadd.xlane.f32.xlu0 %v470
    %v472 = vpop.xlane.xlu0 %471
    %v473 = vrcp.pop %v472
    %v474 = vmul.f32 %v469, %v473
    %v475 = vadd.f32 %v474, 0.0
    %v476 = vpack.c.bf16 %v474, %v474
    %v478 = vsel %vm412, %v476, 0
    %480 = vmatprep.subr.bf16.mxu0 0
    %481 = vmatpush1.bf16.msra.mxu0 0
    %482 = vmatprep.subr.bf16.mxu0 0
    %483 = vmatpush1.bf16.msra.mxu0 0
    %484 = vmatprep.subr.bf16.mxu0 0
    %485 = vmatpush1.bf16.msra.mxu0 0
    %486 = vmatprep.subr.bf16.mxu0 0
    %487 = vmatpush1.bf16.msra.mxu0 0
    %488 = vmatprep.subr.bf16.mxu0 0
    %489 = vmatpush1.bf16.msra.mxu0 0
    %490 = vmatprep.subr.bf16.mxu0 0
    %491 = vmatpush1.bf16.msra.mxu0 0
    %492 = vmatprep.subr.bf16.mxu0 0
    %493 = vmatpush1.bf16.msra.mxu0 %v411
    %494 = vmatprep.subr.bf16.mxu0 0
    %495 = vmatpush1.bf16.msra.mxu0 %v410
    %496 = vmatprep.subr.bf16.mxu0 0
    %497 = vmatpush2.bf16.msra.mxu0 0
    %498 = vmatprep.subr.bf16.mxu0 0
    %499 = vmatpush2.bf16.msra.mxu0 0
    %500 = vmatprep.subr.bf16.mxu0 0
    %501 = vmatpush2.bf16.msra.mxu0 0
    %502 = vmatprep.subr.bf16.mxu0 0
    %503 = vmatpush2.bf16.msra.mxu0 0
    %504 = vmatprep.subr.bf16.mxu0 0
    %505 = vmatpush2.bf16.msra.mxu0 0
    %506 = vmatprep.subr.bf16.mxu0 0
    %507 = vmatpush2.bf16.msra.mxu0 0
    %508 = vmatprep.subr.bf16.mxu0 0
    %509 = vmatpush2.bf16.msra.mxu0 0
    %510 = vmatprep.subr.bf16.mxu0 0
    %511 = vmatpush2.bf16.msra.mxu0 0
    %512 = vmatprep.mubr.bf16.mxu0 0
    %513 = vmatmul.mubr.bf16.gmra.mxu0 %v478
    %v514 = vpop.f32.mrf.mxu0
    %v515 = vadd.f32 0.0, %v514
    %v516 = vpop.f32.mrf.mxu0
    %v517 = vpop.f32.mrf.mxu0
    %v518 = vpop.f32.mrf.mxu0
    %519 = vdwg.mxu0
    %521 = vrot.lane.b32.xlu0 %v407, 96
    %v522 = vpop.permute.xlu0 %521
    %525 = vrot.lane.b32.xlu0 %v408, 96
    %v526 = vpop.permute.xlu0 %525
    %527 = vrot.lane.b32.xlu0 %v409, 96
    %v528 = vpop.permute.xlu0 %527
    %v530 = vsel %vm412, %v522, 0
    %v533 = vsel %vm412, %v526, 0
    %v536 = vsel %vm412, %v528, 0
    %538 = vmatprep.subr.bf16.mxu0 0
    %539 = vmatpush1.bf16.xpose.msra.mxu0 0
    %540 = vmatprep.subr.bf16.mxu0 0
    %541 = vmatpush1.bf16.xpose.msra.mxu0 0
    %542 = vmatprep.subr.bf16.mxu0 0
    %543 = vmatpush1.bf16.xpose.msra.mxu0 0
    %544 = vmatprep.subr.bf16.mxu0 0
    %545 = vmatpush1.bf16.xpose.msra.mxu0 0
    %546 = vmatprep.subr.bf16.mxu0 0
    %547 = vmatpush1.bf16.xpose.msra.mxu0 0
    %548 = vmatprep.subr.bf16.mxu0 0
    %549 = vmatpush1.bf16.xpose.msra.mxu0 0
    %550 = vmatprep.subr.bf16.mxu0 0
    %551 = vmatpush1.bf16.xpose.msra.mxu0 %v536
    %552 = vmatprep.subr.bf16.mxu0 0
    %553 = vmatpush1.bf16.xpose.msra.mxu0 %v533
    %554 = vmatprep.subr.bf16.mxu0 0
    %555 = vmatpush2.bf16.xpose.msra.mxu0 0
    %556 = vmatprep.subr.bf16.mxu0 0
    %557 = vmatpush2.bf16.xpose.msra.mxu0 0
    %558 = vmatprep.subr.bf16.mxu0 0
    %559 = vmatpush2.bf16.xpose.msra.mxu0 0
    %560 = vmatprep.subr.bf16.mxu0 0
    %561 = vmatpush2.bf16.xpose.msra.mxu0 0
    %562 = vmatprep.subr.bf16.mxu0 0
    %563 = vmatpush2.bf16.xpose.msra.mxu0 0
    %564 = vmatprep.subr.bf16.mxu0 0
    %565 = vmatpush2.bf16.xpose.msra.mxu0 0
    %566 = vmatprep.subr.bf16.mxu0 0
    %567 = vmatpush2.bf16.xpose.msra.mxu0 0
    %568 = vmatprep.subr.bf16.mxu0 0
    %569 = vmatpush2.bf16.xpose.msra.mxu0 0
    %570 = vmatprep.mubr.bf16.mxu0 0
    %571 = vmatmul.mubr.bf16.gmra.mxu0 %v530
    %v572 = vpop.f32.mrf.mxu0
    %v573 = vadd.f32 0.0, %v572
    %v574 = vpop.f32.mrf.mxu0
    %v575 = vpop.f32.mrf.mxu0
    %v576 = vpop.f32.mrf.mxu0
    %577 = vdwg.mxu0
    %v578 = vmul.f32 %v573, 0.17677669
    %v579 = vadd.f32 %v578, %v128
    %v580 = vsel %vm412, %v579, -inf
    %581 = vmax.xlane.f32.xlu0 %v580
    %v582 = vpop.xlane.xlu0 %581
    %v583 = vsub.f32 %v579, %v582
    %v584 = vmul.f32 %v583, 1.442695
    %v585 = vpow.pop %v584
    %v586 = vsel %vm412, %v585, 0.0
    %587 = vadd.xlane.f32.xlu0 %v586
    %v588 = vpop.xlane.xlu0 %587
    %v589 = vrcp.pop %v588
    %v590 = vmul.f32 %v585, %v589
    %v591 = vadd.f32 %v475, %v590
    %v592 = vpack.c.bf16 %v590, %v590
    %595 = vrot.lane.b32.xlu0 %v410, 96
    %v596 = vpop.permute.xlu0 %595
    %597 = vrot.lane.b32.xlu0 %v411, 96
    %v598 = vpop.permute.xlu0 %597
    %v602 = vsel %vm412, %v592, 0
    %604 = vmatprep.subr.bf16.mxu0 0
    %605 = vmatpush1.bf16.msra.mxu0 0
    %606 = vmatprep.subr.bf16.mxu0 0
    %607 = vmatpush1.bf16.msra.mxu0 0
    %608 = vmatprep.subr.bf16.mxu0 0
    %609 = vmatpush1.bf16.msra.mxu0 0
    %610 = vmatprep.subr.bf16.mxu0 0
    %611 = vmatpush1.bf16.msra.mxu0 0
    %612 = vmatprep.subr.bf16.mxu0 0
    %613 = vmatpush1.bf16.msra.mxu0 0
    %614 = vmatprep.subr.bf16.mxu0 0
    %615 = vmatpush1.bf16.msra.mxu0 0
    %616 = vmatprep.subr.bf16.mxu0 0
    %617 = vmatpush1.bf16.msra.mxu0 %v598
    %618 = vmatprep.subr.bf16.mxu0 0
    %619 = vmatpush1.bf16.msra.mxu0 %v596
    %620 = vmatprep.subr.bf16.mxu0 0
    %621 = vmatpush2.bf16.msra.mxu0 0
    %622 = vmatprep.subr.bf16.mxu0 0
    %623 = vmatpush2.bf16.msra.mxu0 0
    %624 = vmatprep.subr.bf16.mxu0 0
    %625 = vmatpush2.bf16.msra.mxu0 0
    %626 = vmatprep.subr.bf16.mxu0 0
    %627 = vmatpush2.bf16.msra.mxu0 0
    %628 = vmatprep.subr.bf16.mxu0 0
    %629 = vmatpush2.bf16.msra.mxu0 0
    %630 = vmatprep.subr.bf16.mxu0 0
    %631 = vmatpush2.bf16.msra.mxu0 0
    %632 = vmatprep.subr.bf16.mxu0 0
    %633 = vmatpush2.bf16.msra.mxu0 0
    %634 = vmatprep.subr.bf16.mxu0 0
    %635 = vmatpush2.bf16.msra.mxu0 0
    %636 = vmatprep.mubr.bf16.mxu0 0
    %637 = vmatmul.mubr.bf16.gmra.mxu0 %v602
    %v638 = vpop.f32.mrf.mxu0
    %v639 = vadd.f32 0.0, %v638
    %v640 = vpop.f32.mrf.mxu0
    %v641 = vpop.f32.mrf.mxu0
    %v642 = vpop.f32.mrf.mxu0
    %643 = vdwg.mxu0
    %644 = vrot.lane.b32.xlu0 %v407, 64
    %v645 = vpop.permute.xlu0 %644
    %646 = vrot.lane.b32.xlu0 %v408, 64
    %v647 = vpop.permute.xlu0 %646
    %648 = vrot.lane.b32.xlu0 %v409, 64
    %v649 = vpop.permute.xlu0 %648
    %v651 = vsel %vm412, %v645, 0
    %v654 = vsel %vm412, %v647, 0
    %v657 = vsel %vm412, %v649, 0
    %659 = vmatprep.subr.bf16.mxu0 0
    %660 = vmatpush1.bf16.xpose.msra.mxu0 0
    %661 = vmatprep.subr.bf16.mxu0 0
    %662 = vmatpush1.bf16.xpose.msra.mxu0 0
    %663 = vmatprep.subr.bf16.mxu0 0
    %664 = vmatpush1.bf16.xpose.msra.mxu0 0
    %665 = vmatprep.subr.bf16.mxu0 0
    %666 = vmatpush1.bf16.xpose.msra.mxu0 0
    %667 = vmatprep.subr.bf16.mxu0 0
    %668 = vmatpush1.bf16.xpose.msra.mxu0 0
    %669 = vmatprep.subr.bf16.mxu0 0
    %670 = vmatpush1.bf16.xpose.msra.mxu0 0
    %671 = vmatprep.subr.bf16.mxu0 0
    %672 = vmatpush1.bf16.xpose.msra.mxu0 %v657
    %673 = vmatprep.subr.bf16.mxu0 0
    %674 = vmatpush1.bf16.xpose.msra.mxu0 %v654
    %675 = vmatprep.subr.bf16.mxu0 0
    %676 = vmatpush2.bf16.xpose.msra.mxu0 0
    %677 = vmatprep.subr.bf16.mxu0 0
    %678 = vmatpush2.bf16.xpose.msra.mxu0 0
    %679 = vmatprep.subr.bf16.mxu0 0
    %680 = vmatpush2.bf16.xpose.msra.mxu0 0
    %681 = vmatprep.subr.bf16.mxu0 0
    %682 = vmatpush2.bf16.xpose.msra.mxu0 0
    %683 = vmatprep.subr.bf16.mxu0 0
    %684 = vmatpush2.bf16.xpose.msra.mxu0 0
    %685 = vmatprep.subr.bf16.mxu0 0
    %686 = vmatpush2.bf16.xpose.msra.mxu0 0
    %687 = vmatprep.subr.bf16.mxu0 0
    %688 = vmatpush2.bf16.xpose.msra.mxu0 0
    %689 = vmatprep.subr.bf16.mxu0 0
    %690 = vmatpush2.bf16.xpose.msra.mxu0 0
    %691 = vmatprep.mubr.bf16.mxu0 0
    %692 = vmatmul.mubr.bf16.gmra.mxu0 %v651
    %v693 = vpop.f32.mrf.mxu0
    %v694 = vadd.f32 0.0, %v693
    %v695 = vpop.f32.mrf.mxu0
    %v696 = vpop.f32.mrf.mxu0
    %v697 = vpop.f32.mrf.mxu0
    %698 = vdwg.mxu0
    %v699 = vmul.f32 %v694, 0.17677669
    %v700 = vadd.f32 %v699, %v128
    %v701 = vsel %vm412, %v700, -inf
    %702 = vmax.xlane.f32.xlu0 %v701
    %v703 = vpop.xlane.xlu0 %702
    %v704 = vsub.f32 %v700, %v703
    %v705 = vmul.f32 %v704, 1.442695
    %v706 = vpow.pop %v705
    %v707 = vsel %vm412, %v706, 0.0
    %708 = vadd.xlane.f32.xlu0 %v707
    %v709 = vpop.xlane.xlu0 %708
    %v710 = vrcp.pop %v709
    %v711 = vmul.f32 %v706, %v710
    %v712 = vadd.f32 %v591, %v711
    %v713 = vpack.c.bf16 %v711, %v711
    %714 = vrot.lane.b32.xlu0 %v410, 64
    %v715 = vpop.permute.xlu0 %714
    %716 = vrot.lane.b32.xlu0 %v411, 64
    %v717 = vpop.permute.xlu0 %716
    %v721 = vsel %vm412, %v713, 0
    %723 = vmatprep.subr.bf16.mxu0 0
    %724 = vmatpush1.bf16.msra.mxu0 0
    %725 = vmatprep.subr.bf16.mxu0 0
    %726 = vmatpush1.bf16.msra.mxu0 0
    %727 = vmatprep.subr.bf16.mxu0 0
    %728 = vmatpush1.bf16.msra.mxu0 0
    %729 = vmatprep.subr.bf16.mxu0 0
    %730 = vmatpush1.bf16.msra.mxu0 0
    %731 = vmatprep.subr.bf16.mxu0 0
    %732 = vmatpush1.bf16.msra.mxu0 0
    %733 = vmatprep.subr.bf16.mxu0 0
    %734 = vmatpush1.bf16.msra.mxu0 0
    %735 = vmatprep.subr.bf16.mxu0 0
    %736 = vmatpush1.bf16.msra.mxu0 %v717
    %737 = vmatprep.subr.bf16.mxu0 0
    %738 = vmatpush1.bf16.msra.mxu0 %v715
    %739 = vmatprep.subr.bf16.mxu0 0
    %740 = vmatpush2.bf16.msra.mxu0 0
    %741 = vmatprep.subr.bf16.mxu0 0
    %742 = vmatpush2.bf16.msra.mxu0 0
    %743 = vmatprep.subr.bf16.mxu0 0
    %744 = vmatpush2.bf16.msra.mxu0 0
    %745 = vmatprep.subr.bf16.mxu0 0
    %746 = vmatpush2.bf16.msra.mxu0 0
    %747 = vmatprep.subr.bf16.mxu0 0
    %748 = vmatpush2.bf16.msra.mxu0 0
    %749 = vmatprep.subr.bf16.mxu0 0
    %750 = vmatpush2.bf16.msra.mxu0 0
    %751 = vmatprep.subr.bf16.mxu0 0
    %752 = vmatpush2.bf16.msra.mxu0 0
    %753 = vmatprep.subr.bf16.mxu0 0
    %754 = vmatpush2.bf16.msra.mxu0 0
    %755 = vmatprep.mubr.bf16.mxu0 0
    %756 = vmatmul.mubr.bf16.gmra.mxu0 %v721
    %v757 = vpop.f32.mrf.mxu0
    %v758 = vadd.f32 0.0, %v757
    %v759 = vpop.f32.mrf.mxu0
    %v760 = vpop.f32.mrf.mxu0
    %v761 = vpop.f32.mrf.mxu0
    %762 = vdwg.mxu0
    %763 = vrot.lane.b32.xlu0 %v407, 32
    %v764 = vpop.permute.xlu0 %763
    %765 = vrot.lane.b32.xlu0 %v408, 32
    %v766 = vpop.permute.xlu0 %765
    %767 = vrot.lane.b32.xlu0 %v409, 32
    %v768 = vpop.permute.xlu0 %767
    %v770 = vsel %vm412, %v764, 0
    %v773 = vsel %vm412, %v766, 0
    %v776 = vsel %vm412, %v768, 0
    %778 = vmatprep.subr.bf16.mxu0 0
    %779 = vmatpush1.bf16.xpose.msra.mxu0 0
    %780 = vmatprep.subr.bf16.mxu0 0
    %781 = vmatpush1.bf16.xpose.msra.mxu0 0
    %782 = vmatprep.subr.bf16.mxu0 0
    %783 = vmatpush1.bf16.xpose.msra.mxu0 0
    %784 = vmatprep.subr.bf16.mxu0 0
    %785 = vmatpush1.bf16.xpose.msra.mxu0 0
    %786 = vmatprep.subr.bf16.mxu0 0
    %787 = vmatpush1.bf16.xpose.msra.mxu0 0
    %788 = vmatprep.subr.bf16.mxu0 0
    %789 = vmatpush1.bf16.xpose.msra.mxu0 0
    %790 = vmatprep.subr.bf16.mxu0 0
    %791 = vmatpush1.bf16.xpose.msra.mxu0 %v776
    %792 = vmatprep.subr.bf16.mxu0 0
    %793 = vmatpush1.bf16.xpose.msra.mxu0 %v773
    %794 = vmatprep.subr.bf16.mxu0 0
    %795 = vmatpush2.bf16.xpose.msra.mxu0 0
    %796 = vmatprep.subr.bf16.mxu0 0
    %797 = vmatpush2.bf16.xpose.msra.mxu0 0
    %798 = vmatprep.subr.bf16.mxu0 0
    %799 = vmatpush2.bf16.xpose.msra.mxu0 0
    %800 = vmatprep.subr.bf16.mxu0 0
    %801 = vmatpush2.bf16.xpose.msra.mxu0 0
    %802 = vmatprep.subr.bf16.mxu0 0
    %803 = vmatpush2.bf16.xpose.msra.mxu0 0
    %804 = vmatprep.subr.bf16.mxu0 0
    %805 = vmatpush2.bf16.xpose.msra.mxu0 0
    %806 = vmatprep.subr.bf16.mxu0 0
    %807 = vmatpush2.bf16.xpose.msra.mxu0 0
    %808 = vmatprep.subr.bf16.mxu0 0
    %809 = vmatpush2.bf16.xpose.msra.mxu0 0
    %810 = vmatprep.mubr.bf16.mxu0 0
    %811 = vmatmul.mubr.bf16.gmra.mxu0 %v770
    %v812 = vpop.f32.mrf.mxu0
    %v813 = vadd.f32 0.0, %v812
    %v814 = vpop.f32.mrf.mxu0
    %v815 = vpop.f32.mrf.mxu0
    %v816 = vpop.f32.mrf.mxu0
    %817 = vdwg.mxu0
    %v818 = vmul.f32 %v813, 0.17677669
    %v819 = vadd.f32 %v818, %v128
    %v820 = vsel %vm412, %v819, -inf
    %821 = vmax.xlane.f32.xlu0 %v820
    %v822 = vpop.xlane.xlu0 %821
    %v823 = vsub.f32 %v819, %v822
    %v824 = vmul.f32 %v823, 1.442695
    %v825 = vpow.pop %v824
    %v826 = vsel %vm412, %v825, 0.0
    %827 = vadd.xlane.f32.xlu0 %v826
    %v828 = vpop.xlane.xlu0 %827
    %v829 = vrcp.pop %v828
    %v830 = vmul.f32 %v825, %v829
    %v831 = vadd.f32 %v712, %v830
    %v832 = vpack.c.bf16 %v830, %v830
    %833 = vrot.lane.b32.xlu0 %v410, 32
    %v834 = vpop.permute.xlu0 %833
    %835 = vrot.lane.b32.xlu0 %v411, 32
    %v836 = vpop.permute.xlu0 %835
    %v840 = vsel %vm412, %v832, 0
    %842 = vmatprep.subr.bf16.mxu0 0
    %843 = vmatpush1.bf16.msra.mxu0 0
    %844 = vmatprep.subr.bf16.mxu0 0
    %845 = vmatpush1.bf16.msra.mxu0 0
    %846 = vmatprep.subr.bf16.mxu0 0
    %847 = vmatpush1.bf16.msra.mxu0 0
    %848 = vmatprep.subr.bf16.mxu0 0
    %849 = vmatpush1.bf16.msra.mxu0 0
    %850 = vmatprep.subr.bf16.mxu0 0
    %851 = vmatpush1.bf16.msra.mxu0 0
    %852 = vmatprep.subr.bf16.mxu0 0
    %853 = vmatpush1.bf16.msra.mxu0 0
    %854 = vmatprep.subr.bf16.mxu0 0
    %855 = vmatpush1.bf16.msra.mxu0 %v836
    %856 = vmatprep.subr.bf16.mxu0 0
    %857 = vmatpush1.bf16.msra.mxu0 %v834
    %858 = vmatprep.subr.bf16.mxu0 0
    %859 = vmatpush2.bf16.msra.mxu0 0
    %860 = vmatprep.subr.bf16.mxu0 0
    %861 = vmatpush2.bf16.msra.mxu0 0
    %862 = vmatprep.subr.bf16.mxu0 0
    %863 = vmatpush2.bf16.msra.mxu0 0
    %864 = vmatprep.subr.bf16.mxu0 0
    %865 = vmatpush2.bf16.msra.mxu0 0
    %866 = vmatprep.subr.bf16.mxu0 0
    %867 = vmatpush2.bf16.msra.mxu0 0
    %868 = vmatprep.subr.bf16.mxu0 0
    %869 = vmatpush2.bf16.msra.mxu0 0
    %870 = vmatprep.subr.bf16.mxu0 0
    %871 = vmatpush2.bf16.msra.mxu0 0
    %872 = vmatprep.subr.bf16.mxu0 0
    %873 = vmatpush2.bf16.msra.mxu0 0
    %874 = vmatprep.mubr.bf16.mxu0 0
    %875 = vmatmul.mubr.bf16.gmra.mxu0 %v840
    %v876 = vpop.f32.mrf.mxu0
    %v877 = vadd.f32 0.0, %v876
    %v878 = vpop.f32.mrf.mxu0
    %v879 = vpop.f32.mrf.mxu0
    %v880 = vpop.f32.mrf.mxu0
    %881 = vdwg.mxu0
    %883 = vrot.lane.b32.xlu0 %v639, 32
    %v884 = vpop.permute.xlu0 %883
    %887 = vrot.lane.b32.xlu0 %v758, 64
    %v888 = vpop.permute.xlu0 %887
    %891 = vrot.lane.b32.xlu0 %v877, 96
    %v892 = vpop.permute.xlu0 %891
    %v894 = vsel %vm412, %v515, %v884
    %vm895 = vcmask 523264
    %v896 = vsel %vm895, %v894, %v888
    %vm897 = vcmask 785408
    %v898 = vsel %vm897, %v896, %v892
    %v899 = vpack.c.bf16 %v898, %v898
    %v900 = vld [vmem:[%s5] sm:$0xf]
    %v901 = vld [vmem:[%s5 + $0x4] sm:$0xf]
    %v902 = vld [vmem:[%s5 + $0x8] sm:$0xf]
    %v903 = vld [vmem:[%s5 + $0xc] sm:$0xf]
    %v904 = vld [vmem:[%s5 + $0x10] sm:$0xf]
    %v905 = vld [vmem:[%s5 + $0x14] sm:$0xf]
    %v906 = vld [vmem:[%s5 + $0x18] sm:$0xf]
    %v907 = vld [vmem:[%s5 + $0x1c] sm:$0xf]
    %v908 = vld [vmem:[%s5 + $0x20] sm:$0xf]
    %v909 = vld [vmem:[%s5 + $0x24] sm:$0xf]
    %v910 = vld [vmem:[%s5 + $0x28] sm:$0xf]
    %v911 = vld [vmem:[%s5 + $0x2c] sm:$0xf]
    %v912 = vld [vmem:[%s5 + $0x30] sm:$0xf]
    %v913 = vld [vmem:[%s5 + $0x34] sm:$0xf]
    %v914 = vld [vmem:[%s5 + $0x38] sm:$0xf]
    %v915 = vld [vmem:[%s5 + $0x3c] sm:$0xf]
    %v916 = vld [vmem:[%s6] sm:$0x1]
    %v918 = vlaneseq
    %v919 = vshrl.u32 %v918, 7
    %v920 = vsub.s32 0, %v919
    %v921 = vrot.slane %v916, %v920
    %v939 = vunpack.c.l.b16 %v900
    %v940 = vunpack.c.l.b16 %v901
    %v941 = vunpack.c.l.b16 %v902
    %v942 = vunpack.c.l.b16 %v903
    %v943 = vunpack.c.l.b16 %v904
    %v944 = vunpack.c.l.b16 %v905
    %v945 = vunpack.c.l.b16 %v906
    %v946 = vunpack.c.l.b16 %v907
    %v947 = vunpack.c.l.b16 %v908
    %v948 = vunpack.c.l.b16 %v909
    %v949 = vunpack.c.l.b16 %v910
    %v950 = vunpack.c.l.b16 %v911
    %v951 = vunpack.c.l.b16 %v912
    %v952 = vunpack.c.l.b16 %v913
    %v953 = vunpack.c.l.b16 %v914
    %v954 = vunpack.c.l.b16 %v915
    %v955 = vpack.c.b16 %v940, %v939
    %v956 = vpack.c.b16 %v942, %v941
    %v957 = vpack.c.b16 %v944, %v943
    %v958 = vpack.c.b16 %v946, %v945
    %v959 = vpack.c.b16 %v948, %v947
    %v960 = vpack.c.b16 %v950, %v949
    %v961 = vpack.c.b16 %v952, %v951
    %v962 = vpack.c.b16 %v954, %v953
    %971 = vmatprep.subr.bf16.mxu0 0
    %972 = vmatpush1.bf16.msra.mxu0 %v962
    %973 = vmatprep.subr.bf16.mxu0 0
    %974 = vmatpush1.bf16.msra.mxu0 %v961
    %975 = vmatprep.subr.bf16.mxu0 0
    %976 = vmatpush1.bf16.msra.mxu0 %v960
    %977 = vmatprep.subr.bf16.mxu0 0
    %978 = vmatpush1.bf16.msra.mxu0 %v959
    %979 = vmatprep.subr.bf16.mxu0 0
    %980 = vmatpush1.bf16.msra.mxu0 %v958
    %981 = vmatprep.subr.bf16.mxu0 0
    %982 = vmatpush1.bf16.msra.mxu0 %v957
    %983 = vmatprep.subr.bf16.mxu0 0
    %984 = vmatpush1.bf16.msra.mxu0 %v956
    %985 = vmatprep.subr.bf16.mxu0 0
    %986 = vmatpush1.bf16.msra.mxu0 %v955
    %987 = vmatprep.subr.bf16.mxu0 0
    %988 = vmatpush2.bf16.msra.mxu0 0
    %989 = vmatprep.subr.bf16.mxu0 0
    %990 = vmatpush2.bf16.msra.mxu0 0
    %991 = vmatprep.subr.bf16.mxu0 0
    %992 = vmatpush2.bf16.msra.mxu0 0
    %993 = vmatprep.subr.bf16.mxu0 0
    %994 = vmatpush2.bf16.msra.mxu0 0
    %995 = vmatprep.subr.bf16.mxu0 0
    %996 = vmatpush2.bf16.msra.mxu0 0
    %997 = vmatprep.subr.bf16.mxu0 0
    %998 = vmatpush2.bf16.msra.mxu0 0
    %999 = vmatprep.subr.bf16.mxu0 0
    %1000 = vmatpush2.bf16.msra.mxu0 0
    %1001 = vmatprep.subr.bf16.mxu0 0
    %1002 = vmatpush2.bf16.msra.mxu0 0
    %1003 = vmatprep.mubr.bf16.mxu0 0
    %1004 = vmatmul.mubr.bf16.gmra.mxu0 %v899
    %v1005 = vpop.f32.mrf.mxu0
    %v1006 = vadd.f32 %v921, %v1005
    %v1007 = vpop.f32.mrf.mxu0
    %v1008 = vpop.f32.mrf.mxu0
    %v1009 = vpop.f32.mrf.mxu0
    %1010 = vdwg.mxu0
    %v1011 = vadd.f32 %v119, %v1006
    %v1012 = vld [vmem:[%s7] sm:$0x1]
    %v1013 = vld [vmem:[%s8] sm:$0x1]
    %1014 = vadd.xlane.f32.xlu0 %v1011
    %v1015 = vpop.xlane.xlu0 %1014
    %v1016 = vrcp.pop 128.0
    %v1017 = vmul.f32 %v1015, %v1016
    %v1018 = vsub.f32 %v1011, %v1017
    %v1019 = vmul.f32 %v1018, %v1018
    %1020 = vadd.xlane.f32.xlu0 %v1019
    %v1021 = vpop.xlane.xlu0 %1020
    %v1022 = vmul.f32 %v1021, %v1016
    %v1023 = vadd.f32 %v1022, 1e-05
    %v1024 = vrsqrt.pop %v1023
    %v1025 = vmul.f32 %v1018, %v1024
    %v1027 = vlaneseq
    %v1028 = vshrl.u32 %v1027, 7
    %v1029 = vsub.s32 0, %v1028
    %v1030 = vrot.slane %v1012, %v1029
    %v1032 = vmul.f32 %v1025, %v1030
    %v1034 = vlaneseq
    %v1035 = vshrl.u32 %v1034, 7
    %v1036 = vsub.s32 0, %v1035
    %v1037 = vrot.slane %v1013, %v1036
    %v1039 = vadd.f32 %v1032, %v1037
    %v1040 = vpack.c.bf16 %v1039, %v1039
    %v1041 = vld [vmem:[#allocation9] sm:$0xff]
    %v1042 = vld [vmem:[#allocation9 + $0x8] sm:$0xff]
    %v1043 = vld [vmem:[#allocation9 + $0x10] sm:$0xff]
    %v1044 = vld [vmem:[#allocation9 + $0x18] sm:$0xff]
    %v1045 = vld [vmem:[#allocation9 + $0x20] sm:$0xff]
    %v1046 = vld [vmem:[#allocation9 + $0x28] sm:$0xff]
    %v1047 = vld [vmem:[#allocation9 + $0x30] sm:$0xff]
    %v1048 = vld [vmem:[#allocation9 + $0x38] sm:$0xff]
    %v1049 = vld [vmem:[#allocation9 + $0x40] sm:$0xff]
    %v1050 = vld [vmem:[#allocation9 + $0x48] sm:$0xff]
    %v1051 = vld [vmem:[#allocation9 + $0x50] sm:$0xff]
    %v1052 = vld [vmem:[#allocation9 + $0x58] sm:$0xff]
    %v1053 = vld [vmem:[#allocation9 + $0x60] sm:$0xff]
    %v1054 = vld [vmem:[#allocation9 + $0x68] sm:$0xff]
    %v1055 = vld [vmem:[#allocation9 + $0x70] sm:$0xff]
    %v1056 = vld [vmem:[#allocation9 + $0x78] sm:$0xff]
    %v1057 = vld [vmem:[#allocation9 + $0x80] sm:$0xff]
    %v1058 = vld [vmem:[#allocation9 + $0x88] sm:$0xff]
    %v1059 = vld [vmem:[#allocation9 + $0x90] sm:$0xff]
    %v1060 = vld [vmem:[#allocation9 + $0x98] sm:$0xff]
    %v1061 = vld [vmem:[#allocation9 + $0xa0] sm:$0xff]
    %v1062 = vld [vmem:[#allocation9 + $0xa8] sm:$0xff]
    %v1063 = vld [vmem:[#allocation9 + $0xb0] sm:$0xff]
    %v1064 = vld [vmem:[#allocation9 + $0xb8] sm:$0xff]
    %v1065 = vld [vmem:[#allocation9 + $0xc0] sm:$0xff]
    %v1066 = vld [vmem:[#allocation9 + $0xc8] sm:$0xff]
    %v1067 = vld [vmem:[#allocation9 + $0xd0] sm:$0xff]
    %v1068 = vld [vmem:[#allocation9 + $0xd8] sm:$0xff]
    %v1069 = vld [vmem:[#allocation9 + $0xe0] sm:$0xff]
    %v1070 = vld [vmem:[#allocation9 + $0xe8] sm:$0xff]
    %v1071 = vld [vmem:[#allocation9 + $0xf0] sm:$0xff]
    %v1072 = vld [vmem:[#allocation9 + $0xf8] sm:$0xff]
    %v1073 = vld [vmem:[%s12] sm:$0xf]
    %v1075 = vlaneseq
    %v1076 = vshrl.u32 %v1075, 7
    %v1077 = vsub.s32 0, %v1076
    %v1078 = vrot.slane %v1073, %v1077
    %v1079 = vlaneseq
    %v1080 = vshrl.u32 %v1079, 7
    %v1081 = vsub.s32 1, %v1080
    %v1082 = vrot.slane %v1073, %v1081
    %v1083 = vlaneseq
    %v1084 = vshrl.u32 %v1083, 7
    %v1085 = vsub.s32 2, %v1084
    %v1086 = vrot.slane %v1073, %v1085
    %v1087 = vlaneseq
    %v1088 = vshrl.u32 %v1087, 7
    %v1089 = vsub.s32 3, %v1088
    %v1090 = vrot.slane %v1073, %v1089
    %v1127 = vunpack.c.l.b16 %v1041
    %v1128 = vunpack.c.h.b16 %v1041
    %v1129 = vunpack.c.l.b16 %v1042
    %v1130 = vunpack.c.h.b16 %v1042
    %v1131 = vunpack.c.l.b16 %v1043
    %v1132 = vunpack.c.h.b16 %v1043
    %v1133 = vunpack.c.l.b16 %v1044
    %v1134 = vunpack.c.h.b16 %v1044
    %v1135 = vunpack.c.l.b16 %v1045
    %v1136 = vunpack.c.h.b16 %v1045
    %v1137 = vunpack.c.l.b16 %v1046
    %v1138 = vunpack.c.h.b16 %v1046
    %v1139 = vunpack.c.l.b16 %v1047
    %v1140 = vunpack.c.h.b16 %v1047
    %v1141 = vunpack.c.l.b16 %v1048
    %v1142 = vunpack.c.h.b16 %v1048
    %v1143 = vunpack.c.l.b16 %v1049
    %v1144 = vunpack.c.h.b16 %v1049
    %v1145 = vunpack.c.l.b16 %v1050
    %v1146 = vunpack.c.h.b16 %v1050
    %v1147 = vunpack.c.l.b16 %v1051
    %v1148 = vunpack.c.h.b16 %v1051
    %v1149 = vunpack.c.l.b16 %v1052
    %v1150 = vunpack.c.h.b16 %v1052
    %v1151 = vunpack.c.l.b16 %v1053
    %v1152 = vunpack.c.h.b16 %v1053
    %v1153 = vunpack.c.l.b16 %v1054
    %v1154 = vunpack.c.h.b16 %v1054
    %v1155 = vunpack.c.l.b16 %v1055
    %v1156 = vunpack.c.h.b16 %v1055
    %v1157 = vunpack.c.l.b16 %v1056
    %v1158 = vunpack.c.h.b16 %v1056
    %v1159 = vunpack.c.l.b16 %v1057
    %v1160 = vunpack.c.h.b16 %v1057
    %v1161 = vunpack.c.l.b16 %v1058
    %v1162 = vunpack.c.h.b16 %v1058
    %v1163 = vunpack.c.l.b16 %v1059
    %v1164 = vunpack.c.h.b16 %v1059
    %v1165 = vunpack.c.l.b16 %v1060
    %v1166 = vunpack.c.h.b16 %v1060
    %v1167 = vunpack.c.l.b16 %v1061
    %v1168 = vunpack.c.h.b16 %v1061
    %v1169 = vunpack.c.l.b16 %v1062
    %v1170 = vunpack.c.h.b16 %v1062
    %v1171 = vunpack.c.l.b16 %v1063
    %v1172 = vunpack.c.h.b16 %v1063
    %v1173 = vunpack.c.l.b16 %v1064
    %v1174 = vunpack.c.h.b16 %v1064
    %v1175 = vunpack.c.l.b16 %v1065
    %v1176 = vunpack.c.h.b16 %v1065
    %v1177 = vunpack.c.l.b16 %v1066
    %v1178 = vunpack.c.h.b16 %v1066
    %v1179 = vunpack.c.l.b16 %v1067
    %v1180 = vunpack.c.h.b16 %v1067
    %v1181 = vunpack.c.l.b16 %v1068
    %v1182 = vunpack.c.h.b16 %v1068
    %v1183 = vunpack.c.l.b16 %v1069
    %v1184 = vunpack.c.h.b16 %v1069
    %v1185 = vunpack.c.l.b16 %v1070
    %v1186 = vunpack.c.h.b16 %v1070
    %v1187 = vunpack.c.l.b16 %v1071
    %v1188 = vunpack.c.h.b16 %v1071
    %v1189 = vunpack.c.l.b16 %v1072
    %v1190 = vunpack.c.h.b16 %v1072
    %v1191 = vpack.c.b16 %v1131, %v1127
    %v1192 = vpack.c.b16 %v1132, %v1128
    %v1193 = vpack.c.b16 %v1133, %v1129
    %v1194 = vpack.c.b16 %v1134, %v1130
    %v1195 = vpack.c.b16 %v1139, %v1135
    %v1196 = vpack.c.b16 %v1140, %v1136
    %v1197 = vpack.c.b16 %v1141, %v1137
    %v1198 = vpack.c.b16 %v1142, %v1138
    %v1199 = vpack.c.b16 %v1147, %v1143
    %v1200 = vpack.c.b16 %v1148, %v1144
    %v1201 = vpack.c.b16 %v1149, %v1145
    %v1202 = vpack.c.b16 %v1150, %v1146
    %v1203 = vpack.c.b16 %v1155, %v1151
    %v1204 = vpack.c.b16 %v1156, %v1152
    %v1205 = vpack.c.b16 %v1157, %v1153
    %v1206 = vpack.c.b16 %v1158, %v1154
    %v1207 = vpack.c.b16 %v1163, %v1159
    %v1208 = vpack.c.b16 %v1164, %v1160
    %v1209 = vpack.c.b16 %v1165, %v1161
    %v1210 = vpack.c.b16 %v1166, %v1162
    %v1211 = vpack.c.b16 %v1171, %v1167
    %v1212 = vpack.c.b16 %v1172, %v1168
    %v1213 = vpack.c.b16 %v1173, %v1169
    %v1214 = vpack.c.b16 %v1174, %v1170
    %v1215 = vpack.c.b16 %v1179, %v1175
    %v1216 = vpack.c.b16 %v1180, %v1176
    %v1217 = vpack.c.b16 %v1181, %v1177
    %v1218 = vpack.c.b16 %v1182, %v1178
    %v1219 = vpack.c.b16 %v1187, %v1183
    %v1220 = vpack.c.b16 %v1188, %v1184
    %v1221 = vpack.c.b16 %v1189, %v1185
    %v1222 = vpack.c.b16 %v1190, %v1186
    %1255 = vmatprep.subr.bf16.mxu0 %v1220
    %1256 = vmatpush1.bf16.msra.mxu0 %v1219
    %1257 = vmatprep.subr.bf16.mxu0 %v1216
    %1258 = vmatpush1.bf16.msra.mxu0 %v1215
    %1259 = vmatprep.subr.bf16.mxu0 %v1212
    %1260 = vmatpush1.bf16.msra.mxu0 %v1211
    %1261 = vmatprep.subr.bf16.mxu0 %v1208
    %1262 = vmatpush1.bf16.msra.mxu0 %v1207
    %1263 = vmatprep.subr.bf16.mxu0 %v1204
    %1264 = vmatpush1.bf16.msra.mxu0 %v1203
    %1265 = vmatprep.subr.bf16.mxu0 %v1200
    %1266 = vmatpush1.bf16.msra.mxu0 %v1199
    %1267 = vmatprep.subr.bf16.mxu0 %v1196
    %1268 = vmatpush1.bf16.msra.mxu0 %v1195
    %1269 = vmatprep.subr.bf16.mxu0 %v1192
    %1270 = vmatpush1.bf16.msra.mxu0 %v1191
    %1271 = vmatprep.subr.bf16.mxu0 0
    %1272 = vmatpush2.bf16.msra.mxu0 0
    %1273 = vmatprep.subr.bf16.mxu0 0
    %1274 = vmatpush2.bf16.msra.mxu0 0
    %1275 = vmatprep.subr.bf16.mxu0 0
    %1276 = vmatpush2.bf16.msra.mxu0 0
    %1277 = vmatprep.subr.bf16.mxu0 0
    %1278 = vmatpush2.bf16.msra.mxu0 0
    %1279 = vmatprep.subr.bf16.mxu0 0
    %1280 = vmatpush2.bf16.msra.mxu0 0
    %1281 = vmatprep.subr.bf16.mxu0 0
    %1282 = vmatpush2.bf16.msra.mxu0 0
    %1283 = vmatprep.subr.bf16.mxu0 0
    %1284 = vmatpush2.bf16.msra.mxu0 0
    %1285 = vmatprep.subr.bf16.mxu0 0
    %1286 = vmatpush2.bf16.msra.mxu0 0
    %1287 = vmatprep.mubr.bf16.mxu0 0
    %1288 = vmatmul.mubr.bf16.gmra.mxu0 %v1040
    %v1289 = vpop.f32.mrf.mxu0
    %v1290 = vadd.f32 %v1078, %v1289
    %v1291 = vpop.f32.mrf.mxu0
    %v1292 = vadd.f32 %v1082, %v1291
    %v1293 = vpop.f32.mrf.mxu0
    %v1294 = vpop.f32.mrf.mxu0
    %1295 = vdwg.mxu0
    %1296 = vmatprep.subr.bf16.mxu0 %v1222
    %1297 = vmatpush1.bf16.msra.mxu0 %v1221
    %1298 = vmatprep.subr.bf16.mxu0 %v1218
    %1299 = vmatpush1.bf16.msra.mxu0 %v1217
    %1300 = vmatprep.subr.bf16.mxu0 %v1214
    %1301 = vmatpush1.bf16.msra.mxu0 %v1213
    %1302 = vmatprep.subr.bf16.mxu0 %v1210
    %1303 = vmatpush1.bf16.msra.mxu0 %v1209
    %1304 = vmatprep.subr.bf16.mxu0 %v1206
    %1305 = vmatpush1.bf16.msra.mxu0 %v1205
    %1306 = vmatprep.subr.bf16.mxu0 %v1202
    %1307 = vmatpush1.bf16.msra.mxu0 %v1201
    %1308 = vmatprep.subr.bf16.mxu0 %v1198
    %1309 = vmatpush1.bf16.msra.mxu0 %v1197
    %1310 = vmatprep.subr.bf16.mxu0 %v1194
    %1311 = vmatpush1.bf16.msra.mxu0 %v1193
    %1312 = vmatprep.subr.bf16.mxu0 0
    %1313 = vmatpush2.bf16.msra.mxu0 0
    %1314 = vmatprep.subr.bf16.mxu0 0
    %1315 = vmatpush2.bf16.msra.mxu0 0
    %1316 = vmatprep.subr.bf16.mxu0 0
    %1317 = vmatpush2.bf16.msra.mxu0 0
    %1318 = vmatprep.subr.bf16.mxu0 0
    %1319 = vmatpush2.bf16.msra.mxu0 0
    %1320 = vmatprep.subr.bf16.mxu0 0
    %1321 = vmatpush2.bf16.msra.mxu0 0
    %1322 = vmatprep.subr.bf16.mxu0 0
    %1323 = vmatpush2.bf16.msra.mxu0 0
    %1324 = vmatprep.subr.bf16.mxu0 0
    %1325 = vmatpush2.bf16.msra.mxu0 0
    %1326 = vmatprep.subr.bf16.mxu0 0
    %1327 = vmatpush2.bf16.msra.mxu0 0
    %1328 = vmatprep.mubr.bf16.mxu0 0
    %1329 = vmatmul.mubr.bf16.gmra.mxu0 %v1040
    %v1330 = vpop.f32.mrf.mxu0
    %v1331 = vadd.f32 %v1086, %v1330
    %v1332 = vpop.f32.mrf.mxu0
    %v1333 = vadd.f32 %v1090, %v1332
    %v1334 = vpop.f32.mrf.mxu0
    %v1335 = vpop.f32.mrf.mxu0
    %1336 = vdwg.mxu0
    %v1337 = vmax.f32 %v1290, 0.0
    %v1338 = vmax.f32 %v1292, 0.0
    %v1339 = vmax.f32 %v1331, 0.0
    %v1340 = vmax.f32 %v1333, 0.0
    %v1341 = vpack.c.bf16 %v1337, %v1337
    %v1342 = vpack.c.bf16 %v1338, %v1338
    %v1343 = vpack.c.bf16 %v1339, %v1339
    %v1344 = vpack.c.bf16 %v1340, %v1340
    %v1345 = vld [vmem:[#allocation11] sm:$0xf]
    %v1346 = vld [vmem:[#allocation11 + $0x4] sm:$0xf]
    %v1347 = vld [vmem:[#allocation11 + $0x8] sm:$0xf]
    %v1348 = vld [vmem:[#allocation11 + $0xc] sm:$0xf]
    %v1349 = vld [vmem:[#allocation11 + $0x10] sm:$0xf]
    %v1350 = vld [vmem:[#allocation11 + $0x14] sm:$0xf]
    %v1351 = vld [vmem:[#allocation11 + $0x18] sm:$0xf]
    %v1352 = vld [vmem:[#allocation11 + $0x1c] sm:$0xf]
    %v1353 = vld [vmem:[#allocation11 + $0x20] sm:$0xf]
    %v1354 = vld [vmem:[#allocation11 + $0x24] sm:$0xf]
    %v1355 = vld [vmem:[#allocation11 + $0x28] sm:$0xf]
    %v1356 = vld [vmem:[#allocation11 + $0x2c] sm:$0xf]
    %v1357 = vld [vmem:[#allocation11 + $0x30] sm:$0xf]
    %v1358 = vld [vmem:[#allocation11 + $0x34] sm:$0xf]
    %v1359 = vld [vmem:[#allocation11 + $0x38] sm:$0xf]
    %v1360 = vld [vmem:[#allocation11 + $0x3c] sm:$0xf]
    %v1361 = vld [vmem:[#allocation11 + $0x40] sm:$0xf]
    %v1362 = vld [vmem:[#allocation11 + $0x44] sm:$0xf]
    %v1363 = vld [vmem:[#allocation11 + $0x48] sm:$0xf]
    %v1364 = vld [vmem:[#allocation11 + $0x4c] sm:$0xf]
    %v1365 = vld [vmem:[#allocation11 + $0x50] sm:$0xf]
    %v1366 = vld [vmem:[#allocation11 + $0x54] sm:$0xf]
    %v1367 = vld [vmem:[#allocation11 + $0x58] sm:$0xf]
    %v1368 = vld [vmem:[#allocation11 + $0x5c] sm:$0xf]
    %v1369 = vld [vmem:[#allocation11 + $0x60] sm:$0xf]
    %v1370 = vld [vmem:[#allocation11 + $0x64] sm:$0xf]
    %v1371 = vld [vmem:[#allocation11 + $0x68] sm:$0xf]
    %v1372 = vld [vmem:[#allocation11 + $0x6c] sm:$0xf]
    %v1373 = vld [vmem:[#allocation11 + $0x70] sm:$0xf]
    %v1374 = vld [vmem:[#allocation11 + $0x74] sm:$0xf]
    %v1375 = vld [vmem:[#allocation11 + $0x78] sm:$0xf]
    %v1376 = vld [vmem:[#allocation11 + $0x7c] sm:$0xf]
    %v1377 = vld [vmem:[#allocation11 + $0x80] sm:$0xf]
    %v1378 = vld [vmem:[#allocation11 + $0x84] sm:$0xf]
    %v1379 = vld [vmem:[#allocation11 + $0x88] sm:$0xf]
    %v1380 = vld [vmem:[#allocation11 + $0x8c] sm:$0xf]
    %v1381 = vld [vmem:[#allocation11 + $0x90] sm:$0xf]
    %v1382 = vld [vmem:[#allocation11 + $0x94] sm:$0xf]
    %v1383 = vld [vmem:[#allocation11 + $0x98] sm:$0xf]
    %v1384 = vld [vmem:[#allocation11 + $0x9c] sm:$0xf]
    %v1385 = vld [vmem:[#allocation11 + $0xa0] sm:$0xf]
    %v1386 = vld [vmem:[#allocation11 + $0xa4] sm:$0xf]
    %v1387 = vld [vmem:[#allocation11 + $0xa8] sm:$0xf]
    %v1388 = vld [vmem:[#allocation11 + $0xac] sm:$0xf]
    %v1389 = vld [vmem:[#allocation11 + $0xb0] sm:$0xf]
    %v1390 = vld [vmem:[#allocation11 + $0xb4] sm:$0xf]
    %v1391 = vld [vmem:[#allocation11 + $0xb8] sm:$0xf]
    %v1392 = vld [vmem:[#allocation11 + $0xbc] sm:$0xf]
    %v1393 = vld [vmem:[#allocation11 + $0xc0] sm:$0xf]
    %v1394 = vld [vmem:[#allocation11 + $0xc4] sm:$0xf]
    %v1395 = vld [vmem:[#allocation11 + $0xc8] sm:$0xf]
    %v1396 = vld [vmem:[#allocation11 + $0xcc] sm:$0xf]
    %v1397 = vld [vmem:[#allocation11 + $0xd0] sm:$0xf]
    %v1398 = vld [vmem:[#allocation11 + $0xd4] sm:$0xf]
    %v1399 = vld [vmem:[#allocation11 + $0xd8] sm:$0xf]
    %v1400 = vld [vmem:[#allocation11 + $0xdc] sm:$0xf]
    %v1401 = vld [vmem:[#allocation11 + $0xe0] sm:$0xf]
    %v1402 = vld [vmem:[#allocation11 + $0xe4] sm:$0xf]
    %v1403 = vld [vmem:[#allocation11 + $0xe8] sm:$0xf]
    %v1404 = vld [vmem:[#allocation11 + $0xec] sm:$0xf]
    %v1405 = vld [vmem:[#allocation11 + $0xf0] sm:$0xf]
    %v1406 = vld [vmem:[#allocation11 + $0xf4] sm:$0xf]
    %v1407 = vld [vmem:[#allocation11 + $0xf8] sm:$0xf]
    %v1408 = vld [vmem:[#allocation11 + $0xfc] sm:$0xf]
    %v1409 = vld [vmem:[%s14] sm:$0x1]
    %v1411 = vlaneseq
    %v1412 = vshrl.u32 %v1411, 7
    %v1413 = vsub.s32 0, %v1412
    %v1414 = vrot.slane %v1409, %v1413
    %v1480 = vunpack.c.l.b16 %v1345
    %v1481 = vunpack.c.l.b16 %v1346
    %v1482 = vunpack.c.l.b16 %v1347
    %v1483 = vunpack.c.l.b16 %v1348
    %v1484 = vunpack.c.l.b16 %v1349
    %v1485 = vunpack.c.l.b16 %v1350
    %v1486 = vunpack.c.l.b16 %v1351
    %v1487 = vunpack.c.l.b16 %v1352
    %v1488 = vunpack.c.l.b16 %v1353
    %v1489 = vunpack.c.l.b16 %v1354
    %v1490 = vunpack.c.l.b16 %v1355
    %v1491 = vunpack.c.l.b16 %v1356
    %v1492 = vunpack.c.l.b16 %v1357
    %v1493 = vunpack.c.l.b16 %v1358
    %v1494 = vunpack.c.l.b16 %v1359
    %v1495 = vunpack.c.l.b16 %v1360
    %v1496 = vunpack.c.l.b16 %v1361
    %v1497 = vunpack.c.l.b16 %v1362
    %v1498 = vunpack.c.l.b16 %v1363
    %v1499 = vunpack.c.l.b16 %v1364
    %v1500 = vunpack.c.l.b16 %v1365
    %v1501 = vunpack.c.l.b16 %v1366
    %v1502 = vunpack.c.l.b16 %v1367
    %v1503 = vunpack.c.l.b16 %v1368
    %v1504 = vunpack.c.l.b16 %v1369
    %v1505 = vunpack.c.l.b16 %v1370
    %v1506 = vunpack.c.l.b16 %v1371
    %v1507 = vunpack.c.l.b16 %v1372
    %v1508 = vunpack.c.l.b16 %v1373
    %v1509 = vunpack.c.l.b16 %v1374
    %v1510 = vunpack.c.l.b16 %v1375
    %v1511 = vunpack.c.l.b16 %v1376
    %v1512 = vunpack.c.l.b16 %v1377
    %v1513 = vunpack.c.l.b16 %v1378
    %v1514 = vunpack.c.l.b16 %v1379
    %v1515 = vunpack.c.l.b16 %v1380
    %v1516 = vunpack.c.l.b16 %v1381
    %v1517 = vunpack.c.l.b16 %v1382
    %v1518 = vunpack.c.l.b16 %v1383
    %v1519 = vunpack.c.l.b16 %v1384
    %v1520 = vunpack.c.l.b16 %v1385
    %v1521 = vunpack.c.l.b16 %v1386
    %v1522 = vunpack.c.l.b16 %v1387
    %v1523 = vunpack.c.l.b16 %v1388
    %v1524 = vunpack.c.l.b16 %v1389
    %v1525 = vunpack.c.l.b16 %v1390
    %v1526 = vunpack.c.l.b16 %v1391
    %v1527 = vunpack.c.l.b16 %v1392
    %v1528 = vunpack.c.l.b16 %v1393
    %v1529 = vunpack.c.l.b16 %v1394
    %v1530 = vunpack.c.l.b16 %v1395
    %v1531 = vunpack.c.l.b16 %v1396
    %v1532 = vunpack.c.l.b16 %v1397
    %v1533 = vunpack.c.l.b16 %v1398
    %v1534 = vunpack.c.l.b16 %v1399
    %v1535 = vunpack.c.l.b16 %v1400
    %v1536 = vunpack.c.l.b16 %v1401
    %v1537 = vunpack.c.l.b16 %v1402
    %v1538 = vunpack.c.l.b16 %v1403
    %v1539 = vunpack.c.l.b16 %v1404
    %v1540 = vunpack.c.l.b16 %v1405
    %v1541 = vunpack.c.l.b16 %v1406
    %v1542 = vunpack.c.l.b16 %v1407
    %v1543 = vunpack.c.l.b16 %v1408
    %v1544 = vpack.c.b16 %v1481, %v1480
    %v1545 = vpack.c.b16 %v1483, %v1482
    %v1546 = vpack.c.b16 %v1485, %v1484
    %v1547 = vpack.c.b16 %v1487, %v1486
    %v1548 = vpack.c.b16 %v1489, %v1488
    %v1549 = vpack.c.b16 %v1491, %v1490
    %v1550 = vpack.c.b16 %v1493, %v1492
    %v1551 = vpack.c.b16 %v1495, %v1494
    %v1552 = vpack.c.b16 %v1497, %v1496
    %v1553 = vpack.c.b16 %v1499, %v1498
    %v1554 = vpack.c.b16 %v1501, %v1500
    %v1555 = vpack.c.b16 %v1503, %v1502
    %v1556 = vpack.c.b16 %v1505, %v1504
    %v1557 = vpack.c.b16 %v1507, %v1506
    %v1558 = vpack.c.b16 %v1509, %v1508
    %v1559 = vpack.c.b16 %v1511, %v1510
    %v1560 = vpack.c.b16 %v1513, %v1512
    %v1561 = vpack.c.b16 %v1515, %v1514
    %v1562 = vpack.c.b16 %v1517, %v1516
    %v1563 = vpack.c.b16 %v1519, %v1518
    %v1564 = vpack.c.b16 %v1521, %v1520
    %v1565 = vpack.c.b16 %v1523, %v1522
    %v1566 = vpack.c.b16 %v1525, %v1524
    %v1567 = vpack.c.b16 %v1527, %v1526
    %v1568 = vpack.c.b16 %v1529, %v1528
    %v1569 = vpack.c.b16 %v1531, %v1530
    %v1570 = vpack.c.b16 %v1533, %v1532
    %v1571 = vpack.c.b16 %v1535, %v1534
    %v1572 = vpack.c.b16 %v1537, %v1536
    %v1573 = vpack.c.b16 %v1539, %v1538
    %v1574 = vpack.c.b16 %v1541, %v1540
    %v1575 = vpack.c.b16 %v1543, %v1542
    %1608 = vmatprep.subr.bf16.mxu0 0
    %1609 = vmatpush1.bf16.msra.mxu0 %v1551
    %1610 = vmatprep.subr.bf16.mxu0 0
    %1611 = vmatpush1.bf16.msra.mxu0 %v1550
    %1612 = vmatprep.subr.bf16.mxu0 0
    %1613 = vmatpush1.bf16.msra.mxu0 %v1549
    %1614 = vmatprep.subr.bf16.mxu0 0
    %1615 = vmatpush1.bf16.msra.mxu0 %v1548
    %1616 = vmatprep.subr.bf16.mxu0 0
    %1617 = vmatpush1.bf16.msra.mxu0 %v1547
    %1618 = vmatprep.subr.bf16.mxu0 0
    %1619 = vmatpush1.bf16.msra.mxu0 %v1546
    %1620 = vmatprep.subr.bf16.mxu0 0
    %1621 = vmatpush1.bf16.msra.mxu0 %v1545
    %1622 = vmatprep.subr.bf16.mxu0 0
    %1623 = vmatpush1.bf16.msra.mxu0 %v1544
    %1624 = vmatprep.subr.bf16.mxu0 0
    %1625 = vmatpush2.bf16.msra.mxu0 %v1559
    %1626 = vmatprep.subr.bf16.mxu0 0
    %1627 = vmatpush2.bf16.msra.mxu0 %v1558
    %1628 = vmatprep.subr.bf16.mxu0 0
    %1629 = vmatpush2.bf16.msra.mxu0 %v1557
    %1630 = vmatprep.subr.bf16.mxu0 0
    %1631 = vmatpush2.bf16.msra.mxu0 %v1556
    %1632 = vmatprep.subr.bf16.mxu0 0
    %1633 = vmatpush2.bf16.msra.mxu0 %v1555
    %1634 = vmatprep.subr.bf16.mxu0 0
    %1635 = vmatpush2.bf16.msra.mxu0 %v1554
    %1636 = vmatprep.subr.bf16.mxu0 0
    %1637 = vmatpush2.bf16.msra.mxu0 %v1553
    %1638 = vmatprep.subr.bf16.mxu0 0
    %1639 = vmatpush2.bf16.msra.mxu0 %v1552
    %1640 = vmatprep.mubr.bf16.mxu0 %v1342
    %1641 = vmatmul.mubr.bf16.gmra.mxu0 %v1341
    %v1642 = vpop.f32.mrf.mxu0
    %v1643 = vadd.f32 %v1414, %v1642
    %v1644 = vpop.f32.mrf.mxu0
    %v1645 = vpop.f32.mrf.mxu0
    %v1646 = vpop.f32.mrf.mxu0
    %1647 = vdwg.mxu0
    %1648 = vmatprep.subr.bf16.mxu0 0
    %1649 = vmatpush1.bf16.msra.mxu0 %v1567
    %1650 = vmatprep.subr.bf16.mxu0 0
    %1651 = vmatpush1.bf16.msra.mxu0 %v1566
    %1652 = vmatprep.subr.bf16.mxu0 0
    %1653 = vmatpush1.bf16.msra.mxu0 %v1565
    %1654 = vmatprep.subr.bf16.mxu0 0
    %1655 = vmatpush1.bf16.msra.mxu0 %v1564
    %1656 = vmatprep.subr.bf16.mxu0 0
    %1657 = vmatpush1.bf16.msra.mxu0 %v1563
    %1658 = vmatprep.subr.bf16.mxu0 0
    %1659 = vmatpush1.bf16.msra.mxu0 %v1562
    %1660 = vmatprep.subr.bf16.mxu0 0
    %1661 = vmatpush1.bf16.msra.mxu0 %v1561
    %1662 = vmatprep.subr.bf16.mxu0 0
    %1663 = vmatpush1.bf16.msra.mxu0 %v1560
    %1664 = vmatprep.subr.bf16.mxu0 0
    %1665 = vmatpush2.bf16.msra.mxu0 %v1575
    %1666 = vmatprep.subr.bf16.mxu0 0
    %1667 = vmatpush2.bf16.msra.mxu0 %v1574
    %1668 = vmatprep.subr.bf16.mxu0 0
    %1669 = vmatpush2.bf16.msra.mxu0 %v1573
    %1670 = vmatprep.subr.bf16.mxu0 0
    %1671 = vmatpush2.bf16.msra.mxu0 %v1572
    %1672 = vmatprep.subr.bf16.mxu0 0
    %1673 = vmatpush2.bf16.msra.mxu0 %v1571
    %1674 = vmatprep.subr.bf16.mxu0 0
    %1675 = vmatpush2.bf16.msra.mxu0 %v1570
    %1676 = vmatprep.subr.bf16.mxu0 0
    %1677 = vmatpush2.bf16.msra.mxu0 %v1569
    %1678 = vmatprep.subr.bf16.mxu0 0
    %1679 = vmatpush2.bf16.msra.mxu0 %v1568
    %1680 = vmatprep.mubr.bf16.mxu0 %v1344
    %1681 = vmatmul.mubr.bf16.gmra.mxu0 %v1343
    %v1682 = vpop.f32.mrf.mxu0
    %v1683 = vadd.f32 %v1643, %v1682
    %v1684 = vpop.f32.mrf.mxu0
    %v1685 = vpop.f32.mrf.mxu0
    %v1686 = vpop.f32.mrf.mxu0
    %1687 = vdwg.mxu0
    %v1688 = vadd.f32 %v1039, %v1683
    %v1689 = vld [vmem:[#allocation8] sm:$0x1]
    %v1690 = vld [vmem:[%s10] sm:$0x1]
    %1691 = vadd.xlane.f32.xlu0 %v1688
    %v1692 = vpop.xlane.xlu0 %1691
    %v1693 = vmul.f32 %v1692, %v1016
    %v1694 = vsub.f32 %v1688, %v1693
    %v1695 = vmul.f32 %v1694, %v1694
    %1696 = vadd.xlane.f32.xlu0 %v1695
    %v1697 = vpop.xlane.xlu0 %1696
    %v1698 = vmul.f32 %v1697, %v1016
    %v1699 = vadd.f32 %v1698, 1e-05
    %v1700 = vrsqrt.pop %v1699
    %v1701 = vmul.f32 %v1694, %v1700
    %v1703 = vlaneseq
    %v1704 = vshrl.u32 %v1703, 7
    %v1705 = vsub.s32 0, %v1704
    %v1706 = vrot.slane %v1689, %v1705
    %v1708 = vmul.f32 %v1701, %v1706
    %v1710 = vlaneseq
    %v1711 = vshrl.u32 %v1710, 7
    %v1712 = vsub.s32 0, %v1711
    %v1713 = vrot.slane %v1690, %v1712
    %v1715 = vadd.f32 %v1708, %v1713
    %1716 = vst [vmem:[#allocation12] sm:$0xff] %v1715
    %v1717 = vmul.f32 %v831, 0.25
    %v1718 = vadd.f32 %v1717, 1e-08
    %v1719 = vlog2.pop %v1718
    %v1720 = vmul.f32 %v1719, 0.6931472
    %v1721 = vmul.f32 %v1717, %v1720
    %v1722 = vsel %vm412, %v1721, 0.0
    %1723 = vadd.xlane.f32.xlu0 %v1722
    %v1724 = vpop.xlane.xlu0 %1723
    %v1725 = vsub.f32 0.0, %v1724
    %1726 = vst [vmem:[%s16] sm:$0xff] %v1725
    // Predicated region
    $region82: #{step.1} parent=1 // pred_check
      _
    $region83: #{step.1} parent=1 // pred_check_branch
      %1728 = sbr.rel (0) target = $region85
    $region84: #{step.1} parent=1 // pred_region
      %s1730 = ssub.s32 128, 128
      %1731 = vsyncadd [#allocation5], %s1730
      %s1733 = sshll.u32 [#allocation12], 4
      %s1734 = int_to_ptr.vmem [resolvable:$true] %s1733
      %1736 = dma.vmem_to_hbm [thread:$0]  %s1734, 128, %s15, [#allocation5]
    $region85: #{step.1} parent=1 // pred_fallthru
      _
    // Predicated region
    $region86: #{step.1} parent=1 // pred_check
      _
    $region87: #{step.1} parent=1 // pred_check_branch
      %1738 = sbr.rel (0) target = $region89
    $region88: #{step.1} parent=1 // pred_region
      _
    $region89: #{step.1} parent=1 // pred_fallthru
      _
    // Predicated region
    $region90: #{step.1} parent=1 // pred_check
      _
    $region91: #{step.1} parent=1 // pred_check_branch
      %1740 = sbr.rel (0) target = $region93
    $region92: #{step.1} parent=1 // pred_region
      %1741 = dma.done [#allocation5], 128
    $region93: #{step.1} parent=1 // pred_fallthru
      _
    // Predicated region
    $region94: #{step.1} parent=1 // pred_check
      _
    $region95: #{step.1} parent=1 // pred_check_branch
      %1743 = sbr.rel (0) target = $region97
    $region96: #{step.1} parent=1 // pred_region
      _
    $region97: #{step.1} parent=1 // pred_fallthru
      _
    %1744 = vsyncpa [#allocation4], 1
    %1745 = vsyncpa [#allocation7], 1
    %1746 = vsyncpa [#allocation10], 1
    %1747 = vsyncpa [#allocation5], 1

</llo_original>
